<compile_context>
chip_gen: v7x
topology: tpu7x:2x2x1
jax: 0.10.0
libtpu: 0.0.40
codegen_flags: <defaults>
</compile_context>

<pallas_src>
import jax
import jax.numpy as jnp
from jax.experimental import pallas as pl
from jax.experimental.pallas import tpu as pltpu

HIDDEN = 64
LANES = 128


def _mlp_kernel(params_ref, x_ref, o_ref):
    """params_ref: SMEM f32[3*HIDDEN + 1] packed as [w1 | b1 | w2 | b2].
    x_ref / o_ref: VMEM f32[tile_rows, 128] lane-dense batch tiles."""
    x = x_ref[...].astype(jnp.float32)          # (tile_rows, 128)
    acc = jnp.zeros_like(x)
    # Unrolled over the 64 hidden units: scalar weights broadcast from SMEM,
    # everything else is full-tile VPU elementwise work (no MXU, no XLU).
    for h in range(HIDDEN):
        w1h = params_ref[h]
        b1h = params_ref[HIDDEN + h]
        w2h = params_ref[2 * HIDDEN + h]
        acc = acc + jnp.maximum(x * w1h + b1h, 0.0) * w2h
    b2 = params_ref[3 * HIDDEN]
    o_ref[...] = (acc + b2).astype(o_ref.dtype)


def regressor_forward(x, w1, b1, w2, b2, *, tile_rows=512):
    """Forward pass of Regressor.

    x: (N, 1) f32. Weights stored pre-transposed relative to PyTorch:
    w1: (1, 64), b1: (1, 64), w2: (64, 1), b2: (1, 1), so the math is
    y = relu(x @ w1 + b1) @ w2 + b2. Returns (N, 1).
    """
    n = x.shape[0]

    # Fast path: at tiny batches a Pallas call is 100% launch/DMA overhead.
    if n < LANES:
        return jnp.maximum(x @ w1 + b1, 0.0) @ w2 + b2

    # Pack the 193 parameters into one small SMEM-resident vector.
    params = jnp.concatenate(
        [w1.reshape(-1), b1.reshape(-1), w2.reshape(-1), b2.reshape(-1)]
    ).astype(jnp.float32)                                   # (193,)

    # Lane-dense layout: batch on the lane axis, tiled over rows.
    tile_rows = max(8, (tile_rows // 8) * 8)                # sublane-aligned tiles
    rows = -(-n // LANES)
    if rows <= tile_rows:
        tile_r = rows                                       # single full-array tile
        num_tiles = 1
    else:
        tile_r = tile_rows
        num_tiles = -(-rows // tile_r)
    rows_padded = num_tiles * tile_r
    n_padded = rows_padded * LANES

    x_flat = jnp.pad(x.reshape(-1), (0, n_padded - n))
    x2d = x_flat.reshape(rows_padded, LANES)

    out2d = pl.pallas_call(
        _mlp_kernel,
        out_shape=jax.ShapeDtypeStruct((rows_padded, LANES), x.dtype),
        grid=(num_tiles,),
        in_specs=[
            pl.BlockSpec(memory_space=pltpu.MemorySpace.SMEM),  # params (resident)
            pl.BlockSpec((tile_r, LANES), lambda i: (i, 0)),    # x row-tile
        ],
        out_specs=pl.BlockSpec((tile_r, LANES), lambda i: (i, 0)),
        compiler_params=pltpu.CompilerParams(
            dimension_semantics=("parallel",)),
    )(params, x2d)

    return out2d.reshape(-1)[:n].reshape(n, 1)


def _reference(x, w1, b1, w2, b2):
    return jnp.maximum(x @ w1 + b1, 0.0) @ w2 + b2


def init_params(key):
    """Deterministic init mimicking PyTorch's default Linear init
    (uniform(-1/sqrt(fan_in), 1/sqrt(fan_in)))."""
    k1, k2, k3, k4 = jax.random.split(key, 4)
    in1, h, out = 1, HIDDEN, 1
    bound1 = 1.0 / jnp.sqrt(jnp.float32(in1))
    bound2 = 1.0 / jnp.sqrt(jnp.float32(h))
    w1 = jax.random.uniform(k1, (in1, h), jnp.float32, -bound1, bound1)
    b1 = jax.random.uniform(k2, (1, h), jnp.float32, -bound1, bound1)
    w2 = jax.random.uniform(k3, (h, out), jnp.float32, -bound2, bound2)
    b2 = jax.random.uniform(k4, (1, out), jnp.float32, -bound2, bound2)
    return w1, b1, w2, b2


if __name__ == "__main__":
    key = jax.random.PRNGKey(0)
    kx1, kx2, kp = jax.random.split(key, 3)
    w1, b1, w2, b2 = init_params(kp)

    # 1) Tiny batch -> fast path (pure XLA).
    x_small = jax.random.normal(kx1, (8, 1), jnp.float32)
    out_small = jax.block_until_ready(regressor_forward(x_small, w1, b1, w2, b2))
    ref_small = _reference(x_small, w1, b1, w2, b2)
    assert out_small.shape == (8, 1)
    assert jnp.allclose(out_small, ref_small, atol=1e-5, rtol=1e-5)

    # 2) Pallas kernel path: lane-dense tiles, multi-step grid, tail padding
    #    (N=3000 -> 24 rows of 128 lanes, tile_rows=8 -> 3 grid steps).
    n = 3000
    x_big = jax.random.normal(kx2, (n, 1), jnp.float32)
    out_big = jax.block_until_ready(
        regressor_forward(x_big, w1, b1, w2, b2, tile_rows=8))
    ref_big = _reference(x_big, w1, b1, w2, b2)
    assert out_big.shape == (n, 1)
    assert jnp.allclose(out_big, ref_big, atol=1e-4, rtol=1e-4)

    # 3) Same batch with the default (large) tile -> single full-array tile.
    out_big2 = jax.block_until_ready(regressor_forward(x_big, w1, b1, w2, b2))
    assert jnp.allclose(out_big2, ref_big, atol=1e-4, rtol=1e-4)

    print("KERNEL_OK")
</pallas_src>

<mosaic_0001>
module attributes {stable_mosaic.version = 11 : i64} {
  func.func @_mlp_kernel(%arg0: i32, %arg1: memref<193xf32, #tpu.memory_space<smem>>, %arg2: memref<8x128xf32, #tpu.memory_space<vmem>>, %arg3: memref<8x128xf32, #tpu.memory_space<vmem>>) attributes {dimension_semantics = [#tpu.dimension_semantics<parallel>], iteration_bounds = array<i64: 3>, scalar_prefetch = 0 : i64, scratch_operands = 0 : i64, tpu.core_type = #tpu.core_type<tc>, window_params = [{transform_indices = @transform_0, window_bounds = array<i64: 193>}, {transform_indices = @transform_1, window_bounds = array<i64: 8, 128>}, {transform_indices = @transform_2, window_bounds = array<i64: 8, 128>}]} {
    %c0 = arith.constant 0 : index
    %c0_0 = arith.constant 0 : index
    %0 = vector.load %arg2[%c0, %c0_0] : memref<8x128xf32, #tpu.memory_space<vmem>>, vector<8x128xf32>
    %cst = arith.constant 0.000000e+00 : f32
    %1 = vector.broadcast %cst : f32 to vector<8x128xf32>
    %c0_1 = arith.constant 0 : index
    %2 = memref.load %arg1[%c0_1] : memref<193xf32, #tpu.memory_space<smem>>
    %c64 = arith.constant 64 : index
    %3 = memref.load %arg1[%c64] : memref<193xf32, #tpu.memory_space<smem>>
    %c128 = arith.constant 128 : index
    %4 = memref.load %arg1[%c128] : memref<193xf32, #tpu.memory_space<smem>>
    %5 = vector.broadcast %2 : f32 to vector<8x128xf32>
    %6 = arith.mulf %0, %5 : vector<8x128xf32>
    %7 = vector.broadcast %3 : f32 to vector<8x128xf32>
    %8 = arith.addf %6, %7 : vector<8x128xf32>
    %cst_2 = arith.constant 0.000000e+00 : f32
    %9 = vector.broadcast %cst_2 : f32 to vector<8x128xf32>
    %10 = arith.maximumf %8, %9 : vector<8x128xf32>
    %11 = vector.broadcast %4 : f32 to vector<8x128xf32>
    %12 = arith.mulf %10, %11 : vector<8x128xf32>
    %13 = arith.addf %1, %12 : vector<8x128xf32>
    %c1 = arith.constant 1 : index
    %14 = memref.load %arg1[%c1] : memref<193xf32, #tpu.memory_space<smem>>
    %c65 = arith.constant 65 : index
    %15 = memref.load %arg1[%c65] : memref<193xf32, #tpu.memory_space<smem>>
    %c129 = arith.constant 129 : index
    %16 = memref.load %arg1[%c129] : memref<193xf32, #tpu.memory_space<smem>>
    %17 = vector.broadcast %14 : f32 to vector<8x128xf32>
    %18 = arith.mulf %0, %17 : vector<8x128xf32>
    %19 = vector.broadcast %15 : f32 to vector<8x128xf32>
    %20 = arith.addf %18, %19 : vector<8x128xf32>
    %cst_3 = arith.constant 0.000000e+00 : f32
    %21 = vector.broadcast %cst_3 : f32 to vector<8x128xf32>
    %22 = arith.maximumf %20, %21 : vector<8x128xf32>
    %23 = vector.broadcast %16 : f32 to vector<8x128xf32>
    %24 = arith.mulf %22, %23 : vector<8x128xf32>
    %25 = arith.addf %13, %24 : vector<8x128xf32>
    %c2 = arith.constant 2 : index
    %26 = memref.load %arg1[%c2] : memref<193xf32, #tpu.memory_space<smem>>
    %c66 = arith.constant 66 : index
    %27 = memref.load %arg1[%c66] : memref<193xf32, #tpu.memory_space<smem>>
    %c130 = arith.constant 130 : index
    %28 = memref.load %arg1[%c130] : memref<193xf32, #tpu.memory_space<smem>>
    %29 = vector.broadcast %26 : f32 to vector<8x128xf32>
    %30 = arith.mulf %0, %29 : vector<8x128xf32>
    %31 = vector.broadcast %27 : f32 to vector<8x128xf32>
    %32 = arith.addf %30, %31 : vector<8x128xf32>
    %cst_4 = arith.constant 0.000000e+00 : f32
    %33 = vector.broadcast %cst_4 : f32 to vector<8x128xf32>
    %34 = arith.maximumf %32, %33 : vector<8x128xf32>
    %35 = vector.broadcast %28 : f32 to vector<8x128xf32>
    %36 = arith.mulf %34, %35 : vector<8x128xf32>
    %37 = arith.addf %25, %36 : vector<8x128xf32>
    %c3 = arith.constant 3 : index
    %38 = memref.load %arg1[%c3] : memref<193xf32, #tpu.memory_space<smem>>
    %c67 = arith.constant 67 : index
    %39 = memref.load %arg1[%c67] : memref<193xf32, #tpu.memory_space<smem>>
    %c131 = arith.constant 131 : index
    %40 = memref.load %arg1[%c131] : memref<193xf32, #tpu.memory_space<smem>>
    %41 = vector.broadcast %38 : f32 to vector<8x128xf32>
    %42 = arith.mulf %0, %41 : vector<8x128xf32>
    %43 = vector.broadcast %39 : f32 to vector<8x128xf32>
    %44 = arith.addf %42, %43 : vector<8x128xf32>
    %cst_5 = arith.constant 0.000000e+00 : f32
    %45 = vector.broadcast %cst_5 : f32 to vector<8x128xf32>
    %46 = arith.maximumf %44, %45 : vector<8x128xf32>
    %47 = vector.broadcast %40 : f32 to vector<8x128xf32>
    %48 = arith.mulf %46, %47 : vector<8x128xf32>
    %49 = arith.addf %37, %48 : vector<8x128xf32>
    %c4 = arith.constant 4 : index
    %50 = memref.load %arg1[%c4] : memref<193xf32, #tpu.memory_space<smem>>
    %c68 = arith.constant 68 : index
    %51 = memref.load %arg1[%c68] : memref<193xf32, #tpu.memory_space<smem>>
    %c132 = arith.constant 132 : index
    %52 = memref.load %arg1[%c132] : memref<193xf32, #tpu.memory_space<smem>>
    %53 = vector.broadcast %50 : f32 to vector<8x128xf32>
    %54 = arith.mulf %0, %53 : vector<8x128xf32>
    %55 = vector.broadcast %51 : f32 to vector<8x128xf32>
    %56 = arith.addf %54, %55 : vector<8x128xf32>
    %cst_6 = arith.constant 0.000000e+00 : f32
    %57 = vector.broadcast %cst_6 : f32 to vector<8x128xf32>
    %58 = arith.maximumf %56, %57 : vector<8x128xf32>
    %59 = vector.broadcast %52 : f32 to vector<8x128xf32>
    %60 = arith.mulf %58, %59 : vector<8x128xf32>
    %61 = arith.addf %49, %60 : vector<8x128xf32>
    %c5 = arith.constant 5 : index
    %62 = memref.load %arg1[%c5] : memref<193xf32, #tpu.memory_space<smem>>
    %c69 = arith.constant 69 : index
    %63 = memref.load %arg1[%c69] : memref<193xf32, #tpu.memory_space<smem>>
    %c133 = arith.constant 133 : index
    %64 = memref.load %arg1[%c133] : memref<193xf32, #tpu.memory_space<smem>>
    %65 = vector.broadcast %62 : f32 to vector<8x128xf32>
    %66 = arith.mulf %0, %65 : vector<8x128xf32>
    %67 = vector.broadcast %63 : f32 to vector<8x128xf32>
    %68 = arith.addf %66, %67 : vector<8x128xf32>
    %cst_7 = arith.constant 0.000000e+00 : f32
    %69 = vector.broadcast %cst_7 : f32 to vector<8x128xf32>
    %70 = arith.maximumf %68, %69 : vector<8x128xf32>
    %71 = vector.broadcast %64 : f32 to vector<8x128xf32>
    %72 = arith.mulf %70, %71 : vector<8x128xf32>
    %73 = arith.addf %61, %72 : vector<8x128xf32>
    %c6 = arith.constant 6 : index
    %74 = memref.load %arg1[%c6] : memref<193xf32, #tpu.memory_space<smem>>
    %c70 = arith.constant 70 : index
    %75 = memref.load %arg1[%c70] : memref<193xf32, #tpu.memory_space<smem>>
    %c134 = arith.constant 134 : index
    %76 = memref.load %arg1[%c134] : memref<193xf32, #tpu.memory_space<smem>>
    %77 = vector.broadcast %74 : f32 to vector<8x128xf32>
    %78 = arith.mulf %0, %77 : vector<8x128xf32>
    %79 = vector.broadcast %75 : f32 to vector<8x128xf32>
    %80 = arith.addf %78, %79 : vector<8x128xf32>
    %cst_8 = arith.constant 0.000000e+00 : f32
    %81 = vector.broadcast %cst_8 : f32 to vector<8x128xf32>
    %82 = arith.maximumf %80, %81 : vector<8x128xf32>
    %83 = vector.broadcast %76 : f32 to vector<8x128xf32>
    %84 = arith.mulf %82, %83 : vector<8x128xf32>
    %85 = arith.addf %73, %84 : vector<8x128xf32>
    %c7 = arith.constant 7 : index
    %86 = memref.load %arg1[%c7] : memref<193xf32, #tpu.memory_space<smem>>
    %c71 = arith.constant 71 : index
    %87 = memref.load %arg1[%c71] : memref<193xf32, #tpu.memory_space<smem>>
    %c135 = arith.constant 135 : index
    %88 = memref.load %arg1[%c135] : memref<193xf32, #tpu.memory_space<smem>>
    %89 = vector.broadcast %86 : f32 to vector<8x128xf32>
    %90 = arith.mulf %0, %89 : vector<8x128xf32>
    %91 = vector.broadcast %87 : f32 to vector<8x128xf32>
    %92 = arith.addf %90, %91 : vector<8x128xf32>
    %cst_9 = arith.constant 0.000000e+00 : f32
    %93 = vector.broadcast %cst_9 : f32 to vector<8x128xf32>
    %94 = arith.maximumf %92, %93 : vector<8x128xf32>
    %95 = vector.broadcast %88 : f32 to vector<8x128xf32>
    %96 = arith.mulf %94, %95 : vector<8x128xf32>
    %97 = arith.addf %85, %96 : vector<8x128xf32>
    %c8 = arith.constant 8 : index
    %98 = memref.load %arg1[%c8] : memref<193xf32, #tpu.memory_space<smem>>
    %c72 = arith.constant 72 : index
    %99 = memref.load %arg1[%c72] : memref<193xf32, #tpu.memory_space<smem>>
    %c136 = arith.constant 136 : index
    %100 = memref.load %arg1[%c136] : memref<193xf32, #tpu.memory_space<smem>>
    %101 = vector.broadcast %98 : f32 to vector<8x128xf32>
    %102 = arith.mulf %0, %101 : vector<8x128xf32>
    %103 = vector.broadcast %99 : f32 to vector<8x128xf32>
    %104 = arith.addf %102, %103 : vector<8x128xf32>
    %cst_10 = arith.constant 0.000000e+00 : f32
    %105 = vector.broadcast %cst_10 : f32 to vector<8x128xf32>
    %106 = arith.maximumf %104, %105 : vector<8x128xf32>
    %107 = vector.broadcast %100 : f32 to vector<8x128xf32>
    %108 = arith.mulf %106, %107 : vector<8x128xf32>
    %109 = arith.addf %97, %108 : vector<8x128xf32>
    %c9 = arith.constant 9 : index
    %110 = memref.load %arg1[%c9] : memref<193xf32, #tpu.memory_space<smem>>
    %c73 = arith.constant 73 : index
    %111 = memref.load %arg1[%c73] : memref<193xf32, #tpu.memory_space<smem>>
    %c137 = arith.constant 137 : index
    %112 = memref.load %arg1[%c137] : memref<193xf32, #tpu.memory_space<smem>>
    %113 = vector.broadcast %110 : f32 to vector<8x128xf32>
    %114 = arith.mulf %0, %113 : vector<8x128xf32>
    %115 = vector.broadcast %111 : f32 to vector<8x128xf32>
    %116 = arith.addf %114, %115 : vector<8x128xf32>
    %cst_11 = arith.constant 0.000000e+00 : f32
    %117 = vector.broadcast %cst_11 : f32 to vector<8x128xf32>
    %118 = arith.maximumf %116, %117 : vector<8x128xf32>
    %119 = vector.broadcast %112 : f32 to vector<8x128xf32>
    %120 = arith.mulf %118, %119 : vector<8x128xf32>
    %121 = arith.addf %109, %120 : vector<8x128xf32>
    %c10 = arith.constant 10 : index
    %122 = memref.load %arg1[%c10] : memref<193xf32, #tpu.memory_space<smem>>
    %c74 = arith.constant 74 : index
    %123 = memref.load %arg1[%c74] : memref<193xf32, #tpu.memory_space<smem>>
    %c138 = arith.constant 138 : index
    %124 = memref.load %arg1[%c138] : memref<193xf32, #tpu.memory_space<smem>>
    %125 = vector.broadcast %122 : f32 to vector<8x128xf32>
    %126 = arith.mulf %0, %125 : vector<8x128xf32>
    %127 = vector.broadcast %123 : f32 to vector<8x128xf32>
    %128 = arith.addf %126, %127 : vector<8x128xf32>
    %cst_12 = arith.constant 0.000000e+00 : f32
    %129 = vector.broadcast %cst_12 : f32 to vector<8x128xf32>
    %130 = arith.maximumf %128, %129 : vector<8x128xf32>
    %131 = vector.broadcast %124 : f32 to vector<8x128xf32>
    %132 = arith.mulf %130, %131 : vector<8x128xf32>
    %133 = arith.addf %121, %132 : vector<8x128xf32>
    %c11 = arith.constant 11 : index
    %134 = memref.load %arg1[%c11] : memref<193xf32, #tpu.memory_space<smem>>
    %c75 = arith.constant 75 : index
    %135 = memref.load %arg1[%c75] : memref<193xf32, #tpu.memory_space<smem>>
    %c139 = arith.constant 139 : index
    %136 = memref.load %arg1[%c139] : memref<193xf32, #tpu.memory_space<smem>>
    %137 = vector.broadcast %134 : f32 to vector<8x128xf32>
    %138 = arith.mulf %0, %137 : vector<8x128xf32>
    %139 = vector.broadcast %135 : f32 to vector<8x128xf32>
    %140 = arith.addf %138, %139 : vector<8x128xf32>
    %cst_13 = arith.constant 0.000000e+00 : f32
    %141 = vector.broadcast %cst_13 : f32 to vector<8x128xf32>
    %142 = arith.maximumf %140, %141 : vector<8x128xf32>
    %143 = vector.broadcast %136 : f32 to vector<8x128xf32>
    %144 = arith.mulf %142, %143 : vector<8x128xf32>
    %145 = arith.addf %133, %144 : vector<8x128xf32>
    %c12 = arith.constant 12 : index
    %146 = memref.load %arg1[%c12] : memref<193xf32, #tpu.memory_space<smem>>
    %c76 = arith.constant 76 : index
    %147 = memref.load %arg1[%c76] : memref<193xf32, #tpu.memory_space<smem>>
    %c140 = arith.constant 140 : index
    %148 = memref.load %arg1[%c140] : memref<193xf32, #tpu.memory_space<smem>>
    %149 = vector.broadcast %146 : f32 to vector<8x128xf32>
    %150 = arith.mulf %0, %149 : vector<8x128xf32>
    %151 = vector.broadcast %147 : f32 to vector<8x128xf32>
    %152 = arith.addf %150, %151 : vector<8x128xf32>
    %cst_14 = arith.constant 0.000000e+00 : f32
    %153 = vector.broadcast %cst_14 : f32 to vector<8x128xf32>
    %154 = arith.maximumf %152, %153 : vector<8x128xf32>
    %155 = vector.broadcast %148 : f32 to vector<8x128xf32>
    %156 = arith.mulf %154, %155 : vector<8x128xf32>
    %157 = arith.addf %145, %156 : vector<8x128xf32>
    %c13 = arith.constant 13 : index
    %158 = memref.load %arg1[%c13] : memref<193xf32, #tpu.memory_space<smem>>
    %c77 = arith.constant 77 : index
    %159 = memref.load %arg1[%c77] : memref<193xf32, #tpu.memory_space<smem>>
    %c141 = arith.constant 141 : index
    %160 = memref.load %arg1[%c141] : memref<193xf32, #tpu.memory_space<smem>>
    %161 = vector.broadcast %158 : f32 to vector<8x128xf32>
    %162 = arith.mulf %0, %161 : vector<8x128xf32>
    %163 = vector.broadcast %159 : f32 to vector<8x128xf32>
    %164 = arith.addf %162, %163 : vector<8x128xf32>
    %cst_15 = arith.constant 0.000000e+00 : f32
    %165 = vector.broadcast %cst_15 : f32 to vector<8x128xf32>
    %166 = arith.maximumf %164, %165 : vector<8x128xf32>
    %167 = vector.broadcast %160 : f32 to vector<8x128xf32>
    %168 = arith.mulf %166, %167 : vector<8x128xf32>
    %169 = arith.addf %157, %168 : vector<8x128xf32>
    %c14 = arith.constant 14 : index
    %170 = memref.load %arg1[%c14] : memref<193xf32, #tpu.memory_space<smem>>
    %c78 = arith.constant 78 : index
    %171 = memref.load %arg1[%c78] : memref<193xf32, #tpu.memory_space<smem>>
    %c142 = arith.constant 142 : index
    %172 = memref.load %arg1[%c142] : memref<193xf32, #tpu.memory_space<smem>>
    %173 = vector.broadcast %170 : f32 to vector<8x128xf32>
    %174 = arith.mulf %0, %173 : vector<8x128xf32>
    %175 = vector.broadcast %171 : f32 to vector<8x128xf32>
    %176 = arith.addf %174, %175 : vector<8x128xf32>
    %cst_16 = arith.constant 0.000000e+00 : f32
    %177 = vector.broadcast %cst_16 : f32 to vector<8x128xf32>
    %178 = arith.maximumf %176, %177 : vector<8x128xf32>
    %179 = vector.broadcast %172 : f32 to vector<8x128xf32>
    %180 = arith.mulf %178, %179 : vector<8x128xf32>
    %181 = arith.addf %169, %180 : vector<8x128xf32>
    %c15 = arith.constant 15 : index
    %182 = memref.load %arg1[%c15] : memref<193xf32, #tpu.memory_space<smem>>
    %c79 = arith.constant 79 : index
    %183 = memref.load %arg1[%c79] : memref<193xf32, #tpu.memory_space<smem>>
    %c143 = arith.constant 143 : index
    %184 = memref.load %arg1[%c143] : memref<193xf32, #tpu.memory_space<smem>>
    %185 = vector.broadcast %182 : f32 to vector<8x128xf32>
    %186 = arith.mulf %0, %185 : vector<8x128xf32>
    %187 = vector.broadcast %183 : f32 to vector<8x128xf32>
    %188 = arith.addf %186, %187 : vector<8x128xf32>
    %cst_17 = arith.constant 0.000000e+00 : f32
    %189 = vector.broadcast %cst_17 : f32 to vector<8x128xf32>
    %190 = arith.maximumf %188, %189 : vector<8x128xf32>
    %191 = vector.broadcast %184 : f32 to vector<8x128xf32>
    %192 = arith.mulf %190, %191 : vector<8x128xf32>
    %193 = arith.addf %181, %192 : vector<8x128xf32>
    %c16 = arith.constant 16 : index
    %194 = memref.load %arg1[%c16] : memref<193xf32, #tpu.memory_space<smem>>
    %c80 = arith.constant 80 : index
    %195 = memref.load %arg1[%c80] : memref<193xf32, #tpu.memory_space<smem>>
    %c144 = arith.constant 144 : index
    %196 = memref.load %arg1[%c144] : memref<193xf32, #tpu.memory_space<smem>>
    %197 = vector.broadcast %194 : f32 to vector<8x128xf32>
    %198 = arith.mulf %0, %197 : vector<8x128xf32>
    %199 = vector.broadcast %195 : f32 to vector<8x128xf32>
    %200 = arith.addf %198, %199 : vector<8x128xf32>
    %cst_18 = arith.constant 0.000000e+00 : f32
    %201 = vector.broadcast %cst_18 : f32 to vector<8x128xf32>
    %202 = arith.maximumf %200, %201 : vector<8x128xf32>
    %203 = vector.broadcast %196 : f32 to vector<8x128xf32>
    %204 = arith.mulf %202, %203 : vector<8x128xf32>
    %205 = arith.addf %193, %204 : vector<8x128xf32>
    %c17 = arith.constant 17 : index
    %206 = memref.load %arg1[%c17] : memref<193xf32, #tpu.memory_space<smem>>
    %c81 = arith.constant 81 : index
    %207 = memref.load %arg1[%c81] : memref<193xf32, #tpu.memory_space<smem>>
    %c145 = arith.constant 145 : index
    %208 = memref.load %arg1[%c145] : memref<193xf32, #tpu.memory_space<smem>>
    %209 = vector.broadcast %206 : f32 to vector<8x128xf32>
    %210 = arith.mulf %0, %209 : vector<8x128xf32>
    %211 = vector.broadcast %207 : f32 to vector<8x128xf32>
    %212 = arith.addf %210, %211 : vector<8x128xf32>
    %cst_19 = arith.constant 0.000000e+00 : f32
    %213 = vector.broadcast %cst_19 : f32 to vector<8x128xf32>
    %214 = arith.maximumf %212, %213 : vector<8x128xf32>
    %215 = vector.broadcast %208 : f32 to vector<8x128xf32>
    %216 = arith.mulf %214, %215 : vector<8x128xf32>
    %217 = arith.addf %205, %216 : vector<8x128xf32>
    %c18 = arith.constant 18 : index
    %218 = memref.load %arg1[%c18] : memref<193xf32, #tpu.memory_space<smem>>
    %c82 = arith.constant 82 : index
    %219 = memref.load %arg1[%c82] : memref<193xf32, #tpu.memory_space<smem>>
    %c146 = arith.constant 146 : index
    %220 = memref.load %arg1[%c146] : memref<193xf32, #tpu.memory_space<smem>>
    %221 = vector.broadcast %218 : f32 to vector<8x128xf32>
    %222 = arith.mulf %0, %221 : vector<8x128xf32>
    %223 = vector.broadcast %219 : f32 to vector<8x128xf32>
    %224 = arith.addf %222, %223 : vector<8x128xf32>
    %cst_20 = arith.constant 0.000000e+00 : f32
    %225 = vector.broadcast %cst_20 : f32 to vector<8x128xf32>
    %226 = arith.maximumf %224, %225 : vector<8x128xf32>
    %227 = vector.broadcast %220 : f32 to vector<8x128xf32>
    %228 = arith.mulf %226, %227 : vector<8x128xf32>
    %229 = arith.addf %217, %228 : vector<8x128xf32>
    %c19 = arith.constant 19 : index
    %230 = memref.load %arg1[%c19] : memref<193xf32, #tpu.memory_space<smem>>
    %c83 = arith.constant 83 : index
    %231 = memref.load %arg1[%c83] : memref<193xf32, #tpu.memory_space<smem>>
    %c147 = arith.constant 147 : index
    %232 = memref.load %arg1[%c147] : memref<193xf32, #tpu.memory_space<smem>>
    %233 = vector.broadcast %230 : f32 to vector<8x128xf32>
    %234 = arith.mulf %0, %233 : vector<8x128xf32>
    %235 = vector.broadcast %231 : f32 to vector<8x128xf32>
    %236 = arith.addf %234, %235 : vector<8x128xf32>
    %cst_21 = arith.constant 0.000000e+00 : f32
    %237 = vector.broadcast %cst_21 : f32 to vector<8x128xf32>
    %238 = arith.maximumf %236, %237 : vector<8x128xf32>
    %239 = vector.broadcast %232 : f32 to vector<8x128xf32>
    %240 = arith.mulf %238, %239 : vector<8x128xf32>
    %241 = arith.addf %229, %240 : vector<8x128xf32>
    %c20 = arith.constant 20 : index
    %242 = memref.load %arg1[%c20] : memref<193xf32, #tpu.memory_space<smem>>
    %c84 = arith.constant 84 : index
    %243 = memref.load %arg1[%c84] : memref<193xf32, #tpu.memory_space<smem>>
    %c148 = arith.constant 148 : index
    %244 = memref.load %arg1[%c148] : memref<193xf32, #tpu.memory_space<smem>>
    %245 = vector.broadcast %242 : f32 to vector<8x128xf32>
    %246 = arith.mulf %0, %245 : vector<8x128xf32>
    %247 = vector.broadcast %243 : f32 to vector<8x128xf32>
    %248 = arith.addf %246, %247 : vector<8x128xf32>
    %cst_22 = arith.constant 0.000000e+00 : f32
    %249 = vector.broadcast %cst_22 : f32 to vector<8x128xf32>
    %250 = arith.maximumf %248, %249 : vector<8x128xf32>
    %251 = vector.broadcast %244 : f32 to vector<8x128xf32>
    %252 = arith.mulf %250, %251 : vector<8x128xf32>
    %253 = arith.addf %241, %252 : vector<8x128xf32>
    %c21 = arith.constant 21 : index
    %254 = memref.load %arg1[%c21] : memref<193xf32, #tpu.memory_space<smem>>
    %c85 = arith.constant 85 : index
    %255 = memref.load %arg1[%c85] : memref<193xf32, #tpu.memory_space<smem>>
    %c149 = arith.constant 149 : index
    %256 = memref.load %arg1[%c149] : memref<193xf32, #tpu.memory_space<smem>>
    %257 = vector.broadcast %254 : f32 to vector<8x128xf32>
    %258 = arith.mulf %0, %257 : vector<8x128xf32>
    %259 = vector.broadcast %255 : f32 to vector<8x128xf32>
    %260 = arith.addf %258, %259 : vector<8x128xf32>
    %cst_23 = arith.constant 0.000000e+00 : f32
    %261 = vector.broadcast %cst_23 : f32 to vector<8x128xf32>
    %262 = arith.maximumf %260, %261 : vector<8x128xf32>
    %263 = vector.broadcast %256 : f32 to vector<8x128xf32>
    %264 = arith.mulf %262, %263 : vector<8x128xf32>
    %265 = arith.addf %253, %264 : vector<8x128xf32>
    %c22 = arith.constant 22 : index
    %266 = memref.load %arg1[%c22] : memref<193xf32, #tpu.memory_space<smem>>
    %c86 = arith.constant 86 : index
    %267 = memref.load %arg1[%c86] : memref<193xf32, #tpu.memory_space<smem>>
    %c150 = arith.constant 150 : index
    %268 = memref.load %arg1[%c150] : memref<193xf32, #tpu.memory_space<smem>>
    %269 = vector.broadcast %266 : f32 to vector<8x128xf32>
    %270 = arith.mulf %0, %269 : vector<8x128xf32>
    %271 = vector.broadcast %267 : f32 to vector<8x128xf32>
    %272 = arith.addf %270, %271 : vector<8x128xf32>
    %cst_24 = arith.constant 0.000000e+00 : f32
    %273 = vector.broadcast %cst_24 : f32 to vector<8x128xf32>
    %274 = arith.maximumf %272, %273 : vector<8x128xf32>
    %275 = vector.broadcast %268 : f32 to vector<8x128xf32>
    %276 = arith.mulf %274, %275 : vector<8x128xf32>
    %277 = arith.addf %265, %276 : vector<8x128xf32>
    %c23 = arith.constant 23 : index
    %278 = memref.load %arg1[%c23] : memref<193xf32, #tpu.memory_space<smem>>
    %c87 = arith.constant 87 : index
    %279 = memref.load %arg1[%c87] : memref<193xf32, #tpu.memory_space<smem>>
    %c151 = arith.constant 151 : index
    %280 = memref.load %arg1[%c151] : memref<193xf32, #tpu.memory_space<smem>>
    %281 = vector.broadcast %278 : f32 to vector<8x128xf32>
    %282 = arith.mulf %0, %281 : vector<8x128xf32>
    %283 = vector.broadcast %279 : f32 to vector<8x128xf32>
    %284 = arith.addf %282, %283 : vector<8x128xf32>
    %cst_25 = arith.constant 0.000000e+00 : f32
    %285 = vector.broadcast %cst_25 : f32 to vector<8x128xf32>
    %286 = arith.maximumf %284, %285 : vector<8x128xf32>
    %287 = vector.broadcast %280 : f32 to vector<8x128xf32>
    %288 = arith.mulf %286, %287 : vector<8x128xf32>
    %289 = arith.addf %277, %288 : vector<8x128xf32>
    %c24 = arith.constant 24 : index
    %290 = memref.load %arg1[%c24] : memref<193xf32, #tpu.memory_space<smem>>
    %c88 = arith.constant 88 : index
    %291 = memref.load %arg1[%c88] : memref<193xf32, #tpu.memory_space<smem>>
    %c152 = arith.constant 152 : index
    %292 = memref.load %arg1[%c152] : memref<193xf32, #tpu.memory_space<smem>>
    %293 = vector.broadcast %290 : f32 to vector<8x128xf32>
    %294 = arith.mulf %0, %293 : vector<8x128xf32>
    %295 = vector.broadcast %291 : f32 to vector<8x128xf32>
    %296 = arith.addf %294, %295 : vector<8x128xf32>
    %cst_26 = arith.constant 0.000000e+00 : f32
    %297 = vector.broadcast %cst_26 : f32 to vector<8x128xf32>
    %298 = arith.maximumf %296, %297 : vector<8x128xf32>
    %299 = vector.broadcast %292 : f32 to vector<8x128xf32>
    %300 = arith.mulf %298, %299 : vector<8x128xf32>
    %301 = arith.addf %289, %300 : vector<8x128xf32>
    %c25 = arith.constant 25 : index
    %302 = memref.load %arg1[%c25] : memref<193xf32, #tpu.memory_space<smem>>
    %c89 = arith.constant 89 : index
    %303 = memref.load %arg1[%c89] : memref<193xf32, #tpu.memory_space<smem>>
    %c153 = arith.constant 153 : index
    %304 = memref.load %arg1[%c153] : memref<193xf32, #tpu.memory_space<smem>>
    %305 = vector.broadcast %302 : f32 to vector<8x128xf32>
    %306 = arith.mulf %0, %305 : vector<8x128xf32>
    %307 = vector.broadcast %303 : f32 to vector<8x128xf32>
    %308 = arith.addf %306, %307 : vector<8x128xf32>
    %cst_27 = arith.constant 0.000000e+00 : f32
    %309 = vector.broadcast %cst_27 : f32 to vector<8x128xf32>
    %310 = arith.maximumf %308, %309 : vector<8x128xf32>
    %311 = vector.broadcast %304 : f32 to vector<8x128xf32>
    %312 = arith.mulf %310, %311 : vector<8x128xf32>
    %313 = arith.addf %301, %312 : vector<8x128xf32>
    %c26 = arith.constant 26 : index
    %314 = memref.load %arg1[%c26] : memref<193xf32, #tpu.memory_space<smem>>
    %c90 = arith.constant 90 : index
    %315 = memref.load %arg1[%c90] : memref<193xf32, #tpu.memory_space<smem>>
    %c154 = arith.constant 154 : index
    %316 = memref.load %arg1[%c154] : memref<193xf32, #tpu.memory_space<smem>>
    %317 = vector.broadcast %314 : f32 to vector<8x128xf32>
    %318 = arith.mulf %0, %317 : vector<8x128xf32>
    %319 = vector.broadcast %315 : f32 to vector<8x128xf32>
    %320 = arith.addf %318, %319 : vector<8x128xf32>
    %cst_28 = arith.constant 0.000000e+00 : f32
    %321 = vector.broadcast %cst_28 : f32 to vector<8x128xf32>
    %322 = arith.maximumf %320, %321 : vector<8x128xf32>
    %323 = vector.broadcast %316 : f32 to vector<8x128xf32>
    %324 = arith.mulf %322, %323 : vector<8x128xf32>
    %325 = arith.addf %313, %324 : vector<8x128xf32>
    %c27 = arith.constant 27 : index
    %326 = memref.load %arg1[%c27] : memref<193xf32, #tpu.memory_space<smem>>
    %c91 = arith.constant 91 : index
    %327 = memref.load %arg1[%c91] : memref<193xf32, #tpu.memory_space<smem>>
    %c155 = arith.constant 155 : index
    %328 = memref.load %arg1[%c155] : memref<193xf32, #tpu.memory_space<smem>>
    %329 = vector.broadcast %326 : f32 to vector<8x128xf32>
    %330 = arith.mulf %0, %329 : vector<8x128xf32>
    %331 = vector.broadcast %327 : f32 to vector<8x128xf32>
    %332 = arith.addf %330, %331 : vector<8x128xf32>
    %cst_29 = arith.constant 0.000000e+00 : f32
    %333 = vector.broadcast %cst_29 : f32 to vector<8x128xf32>
    %334 = arith.maximumf %332, %333 : vector<8x128xf32>
    %335 = vector.broadcast %328 : f32 to vector<8x128xf32>
    %336 = arith.mulf %334, %335 : vector<8x128xf32>
    %337 = arith.addf %325, %336 : vector<8x128xf32>
    %c28 = arith.constant 28 : index
    %338 = memref.load %arg1[%c28] : memref<193xf32, #tpu.memory_space<smem>>
    %c92 = arith.constant 92 : index
    %339 = memref.load %arg1[%c92] : memref<193xf32, #tpu.memory_space<smem>>
    %c156 = arith.constant 156 : index
    %340 = memref.load %arg1[%c156] : memref<193xf32, #tpu.memory_space<smem>>
    %341 = vector.broadcast %338 : f32 to vector<8x128xf32>
    %342 = arith.mulf %0, %341 : vector<8x128xf32>
    %343 = vector.broadcast %339 : f32 to vector<8x128xf32>
    %344 = arith.addf %342, %343 : vector<8x128xf32>
    %cst_30 = arith.constant 0.000000e+00 : f32
    %345 = vector.broadcast %cst_30 : f32 to vector<8x128xf32>
    %346 = arith.maximumf %344, %345 : vector<8x128xf32>
    %347 = vector.broadcast %340 : f32 to vector<8x128xf32>
    %348 = arith.mulf %346, %347 : vector<8x128xf32>
    %349 = arith.addf %337, %348 : vector<8x128xf32>
    %c29 = arith.constant 29 : index
    %350 = memref.load %arg1[%c29] : memref<193xf32, #tpu.memory_space<smem>>
    %c93 = arith.constant 93 : index
    %351 = memref.load %arg1[%c93] : memref<193xf32, #tpu.memory_space<smem>>
    %c157 = arith.constant 157 : index
    %352 = memref.load %arg1[%c157] : memref<193xf32, #tpu.memory_space<smem>>
    %353 = vector.broadcast %350 : f32 to vector<8x128xf32>
    %354 = arith.mulf %0, %353 : vector<8x128xf32>
    %355 = vector.broadcast %351 : f32 to vector<8x128xf32>
    %356 = arith.addf %354, %355 : vector<8x128xf32>
    %cst_31 = arith.constant 0.000000e+00 : f32
    %357 = vector.broadcast %cst_31 : f32 to vector<8x128xf32>
    %358 = arith.maximumf %356, %357 : vector<8x128xf32>
    %359 = vector.broadcast %352 : f32 to vector<8x128xf32>
    %360 = arith.mulf %358, %359 : vector<8x128xf32>
    %361 = arith.addf %349, %360 : vector<8x128xf32>
    %c30 = arith.constant 30 : index
    %362 = memref.load %arg1[%c30] : memref<193xf32, #tpu.memory_space<smem>>
    %c94 = arith.constant 94 : index
    %363 = memref.load %arg1[%c94] : memref<193xf32, #tpu.memory_space<smem>>
    %c158 = arith.constant 158 : index
    %364 = memref.load %arg1[%c158] : memref<193xf32, #tpu.memory_space<smem>>
    %365 = vector.broadcast %362 : f32 to vector<8x128xf32>
    %366 = arith.mulf %0, %365 : vector<8x128xf32>
    %367 = vector.broadcast %363 : f32 to vector<8x128xf32>
    %368 = arith.addf %366, %367 : vector<8x128xf32>
    %cst_32 = arith.constant 0.000000e+00 : f32
    %369 = vector.broadcast %cst_32 : f32 to vector<8x128xf32>
    %370 = arith.maximumf %368, %369 : vector<8x128xf32>
    %371 = vector.broadcast %364 : f32 to vector<8x128xf32>
    %372 = arith.mulf %370, %371 : vector<8x128xf32>
    %373 = arith.addf %361, %372 : vector<8x128xf32>
    %c31 = arith.constant 31 : index
    %374 = memref.load %arg1[%c31] : memref<193xf32, #tpu.memory_space<smem>>
    %c95 = arith.constant 95 : index
    %375 = memref.load %arg1[%c95] : memref<193xf32, #tpu.memory_space<smem>>
    %c159 = arith.constant 159 : index
    %376 = memref.load %arg1[%c159] : memref<193xf32, #tpu.memory_space<smem>>
    %377 = vector.broadcast %374 : f32 to vector<8x128xf32>
    %378 = arith.mulf %0, %377 : vector<8x128xf32>
    %379 = vector.broadcast %375 : f32 to vector<8x128xf32>
    %380 = arith.addf %378, %379 : vector<8x128xf32>
    %cst_33 = arith.constant 0.000000e+00 : f32
    %381 = vector.broadcast %cst_33 : f32 to vector<8x128xf32>
    %382 = arith.maximumf %380, %381 : vector<8x128xf32>
    %383 = vector.broadcast %376 : f32 to vector<8x128xf32>
    %384 = arith.mulf %382, %383 : vector<8x128xf32>
    %385 = arith.addf %373, %384 : vector<8x128xf32>
    %c32 = arith.constant 32 : index
    %386 = memref.load %arg1[%c32] : memref<193xf32, #tpu.memory_space<smem>>
    %c96 = arith.constant 96 : index
    %387 = memref.load %arg1[%c96] : memref<193xf32, #tpu.memory_space<smem>>
    %c160 = arith.constant 160 : index
    %388 = memref.load %arg1[%c160] : memref<193xf32, #tpu.memory_space<smem>>
    %389 = vector.broadcast %386 : f32 to vector<8x128xf32>
    %390 = arith.mulf %0, %389 : vector<8x128xf32>
    %391 = vector.broadcast %387 : f32 to vector<8x128xf32>
    %392 = arith.addf %390, %391 : vector<8x128xf32>
    %cst_34 = arith.constant 0.000000e+00 : f32
    %393 = vector.broadcast %cst_34 : f32 to vector<8x128xf32>
    %394 = arith.maximumf %392, %393 : vector<8x128xf32>
    %395 = vector.broadcast %388 : f32 to vector<8x128xf32>
    %396 = arith.mulf %394, %395 : vector<8x128xf32>
    %397 = arith.addf %385, %396 : vector<8x128xf32>
    %c33 = arith.constant 33 : index
    %398 = memref.load %arg1[%c33] : memref<193xf32, #tpu.memory_space<smem>>
    %c97 = arith.constant 97 : index
    %399 = memref.load %arg1[%c97] : memref<193xf32, #tpu.memory_space<smem>>
    %c161 = arith.constant 161 : index
    %400 = memref.load %arg1[%c161] : memref<193xf32, #tpu.memory_space<smem>>
    %401 = vector.broadcast %398 : f32 to vector<8x128xf32>
    %402 = arith.mulf %0, %401 : vector<8x128xf32>
    %403 = vector.broadcast %399 : f32 to vector<8x128xf32>
    %404 = arith.addf %402, %403 : vector<8x128xf32>
    %cst_35 = arith.constant 0.000000e+00 : f32
    %405 = vector.broadcast %cst_35 : f32 to vector<8x128xf32>
    %406 = arith.maximumf %404, %405 : vector<8x128xf32>
    %407 = vector.broadcast %400 : f32 to vector<8x128xf32>
    %408 = arith.mulf %406, %407 : vector<8x128xf32>
    %409 = arith.addf %397, %408 : vector<8x128xf32>
    %c34 = arith.constant 34 : index
    %410 = memref.load %arg1[%c34] : memref<193xf32, #tpu.memory_space<smem>>
    %c98 = arith.constant 98 : index
    %411 = memref.load %arg1[%c98] : memref<193xf32, #tpu.memory_space<smem>>
    %c162 = arith.constant 162 : index
    %412 = memref.load %arg1[%c162] : memref<193xf32, #tpu.memory_space<smem>>
    %413 = vector.broadcast %410 : f32 to vector<8x128xf32>
    %414 = arith.mulf %0, %413 : vector<8x128xf32>
    %415 = vector.broadcast %411 : f32 to vector<8x128xf32>
    %416 = arith.addf %414, %415 : vector<8x128xf32>
    %cst_36 = arith.constant 0.000000e+00 : f32
    %417 = vector.broadcast %cst_36 : f32 to vector<8x128xf32>
    %418 = arith.maximumf %416, %417 : vector<8x128xf32>
    %419 = vector.broadcast %412 : f32 to vector<8x128xf32>
    %420 = arith.mulf %418, %419 : vector<8x128xf32>
    %421 = arith.addf %409, %420 : vector<8x128xf32>
    %c35 = arith.constant 35 : index
    %422 = memref.load %arg1[%c35] : memref<193xf32, #tpu.memory_space<smem>>
    %c99 = arith.constant 99 : index
    %423 = memref.load %arg1[%c99] : memref<193xf32, #tpu.memory_space<smem>>
    %c163 = arith.constant 163 : index
    %424 = memref.load %arg1[%c163] : memref<193xf32, #tpu.memory_space<smem>>
    %425 = vector.broadcast %422 : f32 to vector<8x128xf32>
    %426 = arith.mulf %0, %425 : vector<8x128xf32>
    %427 = vector.broadcast %423 : f32 to vector<8x128xf32>
    %428 = arith.addf %426, %427 : vector<8x128xf32>
    %cst_37 = arith.constant 0.000000e+00 : f32
    %429 = vector.broadcast %cst_37 : f32 to vector<8x128xf32>
    %430 = arith.maximumf %428, %429 : vector<8x128xf32>
    %431 = vector.broadcast %424 : f32 to vector<8x128xf32>
    %432 = arith.mulf %430, %431 : vector<8x128xf32>
    %433 = arith.addf %421, %432 : vector<8x128xf32>
    %c36 = arith.constant 36 : index
    %434 = memref.load %arg1[%c36] : memref<193xf32, #tpu.memory_space<smem>>
    %c100 = arith.constant 100 : index
    %435 = memref.load %arg1[%c100] : memref<193xf32, #tpu.memory_space<smem>>
    %c164 = arith.constant 164 : index
    %436 = memref.load %arg1[%c164] : memref<193xf32, #tpu.memory_space<smem>>
    %437 = vector.broadcast %434 : f32 to vector<8x128xf32>
    %438 = arith.mulf %0, %437 : vector<8x128xf32>
    %439 = vector.broadcast %435 : f32 to vector<8x128xf32>
    %440 = arith.addf %438, %439 : vector<8x128xf32>
    %cst_38 = arith.constant 0.000000e+00 : f32
    %441 = vector.broadcast %cst_38 : f32 to vector<8x128xf32>
    %442 = arith.maximumf %440, %441 : vector<8x128xf32>
    %443 = vector.broadcast %436 : f32 to vector<8x128xf32>
    %444 = arith.mulf %442, %443 : vector<8x128xf32>
    %445 = arith.addf %433, %444 : vector<8x128xf32>
    %c37 = arith.constant 37 : index
    %446 = memref.load %arg1[%c37] : memref<193xf32, #tpu.memory_space<smem>>
    %c101 = arith.constant 101 : index
    %447 = memref.load %arg1[%c101] : memref<193xf32, #tpu.memory_space<smem>>
    %c165 = arith.constant 165 : index
    %448 = memref.load %arg1[%c165] : memref<193xf32, #tpu.memory_space<smem>>
    %449 = vector.broadcast %446 : f32 to vector<8x128xf32>
    %450 = arith.mulf %0, %449 : vector<8x128xf32>
    %451 = vector.broadcast %447 : f32 to vector<8x128xf32>
    %452 = arith.addf %450, %451 : vector<8x128xf32>
    %cst_39 = arith.constant 0.000000e+00 : f32
    %453 = vector.broadcast %cst_39 : f32 to vector<8x128xf32>
    %454 = arith.maximumf %452, %453 : vector<8x128xf32>
    %455 = vector.broadcast %448 : f32 to vector<8x128xf32>
    %456 = arith.mulf %454, %455 : vector<8x128xf32>
    %457 = arith.addf %445, %456 : vector<8x128xf32>
    %c38 = arith.constant 38 : index
    %458 = memref.load %arg1[%c38] : memref<193xf32, #tpu.memory_space<smem>>
    %c102 = arith.constant 102 : index
    %459 = memref.load %arg1[%c102] : memref<193xf32, #tpu.memory_space<smem>>
    %c166 = arith.constant 166 : index
    %460 = memref.load %arg1[%c166] : memref<193xf32, #tpu.memory_space<smem>>
    %461 = vector.broadcast %458 : f32 to vector<8x128xf32>
    %462 = arith.mulf %0, %461 : vector<8x128xf32>
    %463 = vector.broadcast %459 : f32 to vector<8x128xf32>
    %464 = arith.addf %462, %463 : vector<8x128xf32>
    %cst_40 = arith.constant 0.000000e+00 : f32
    %465 = vector.broadcast %cst_40 : f32 to vector<8x128xf32>
    %466 = arith.maximumf %464, %465 : vector<8x128xf32>
    %467 = vector.broadcast %460 : f32 to vector<8x128xf32>
    %468 = arith.mulf %466, %467 : vector<8x128xf32>
    %469 = arith.addf %457, %468 : vector<8x128xf32>
    %c39 = arith.constant 39 : index
    %470 = memref.load %arg1[%c39] : memref<193xf32, #tpu.memory_space<smem>>
    %c103 = arith.constant 103 : index
    %471 = memref.load %arg1[%c103] : memref<193xf32, #tpu.memory_space<smem>>
    %c167 = arith.constant 167 : index
    %472 = memref.load %arg1[%c167] : memref<193xf32, #tpu.memory_space<smem>>
    %473 = vector.broadcast %470 : f32 to vector<8x128xf32>
    %474 = arith.mulf %0, %473 : vector<8x128xf32>
    %475 = vector.broadcast %471 : f32 to vector<8x128xf32>
    %476 = arith.addf %474, %475 : vector<8x128xf32>
    %cst_41 = arith.constant 0.000000e+00 : f32
    %477 = vector.broadcast %cst_41 : f32 to vector<8x128xf32>
    %478 = arith.maximumf %476, %477 : vector<8x128xf32>
    %479 = vector.broadcast %472 : f32 to vector<8x128xf32>
    %480 = arith.mulf %478, %479 : vector<8x128xf32>
    %481 = arith.addf %469, %480 : vector<8x128xf32>
    %c40 = arith.constant 40 : index
    %482 = memref.load %arg1[%c40] : memref<193xf32, #tpu.memory_space<smem>>
    %c104 = arith.constant 104 : index
    %483 = memref.load %arg1[%c104] : memref<193xf32, #tpu.memory_space<smem>>
    %c168 = arith.constant 168 : index
    %484 = memref.load %arg1[%c168] : memref<193xf32, #tpu.memory_space<smem>>
    %485 = vector.broadcast %482 : f32 to vector<8x128xf32>
    %486 = arith.mulf %0, %485 : vector<8x128xf32>
    %487 = vector.broadcast %483 : f32 to vector<8x128xf32>
    %488 = arith.addf %486, %487 : vector<8x128xf32>
    %cst_42 = arith.constant 0.000000e+00 : f32
    %489 = vector.broadcast %cst_42 : f32 to vector<8x128xf32>
    %490 = arith.maximumf %488, %489 : vector<8x128xf32>
    %491 = vector.broadcast %484 : f32 to vector<8x128xf32>
    %492 = arith.mulf %490, %491 : vector<8x128xf32>
    %493 = arith.addf %481, %492 : vector<8x128xf32>
    %c41 = arith.constant 41 : index
    %494 = memref.load %arg1[%c41] : memref<193xf32, #tpu.memory_space<smem>>
    %c105 = arith.constant 105 : index
    %495 = memref.load %arg1[%c105] : memref<193xf32, #tpu.memory_space<smem>>
    %c169 = arith.constant 169 : index
    %496 = memref.load %arg1[%c169] : memref<193xf32, #tpu.memory_space<smem>>
    %497 = vector.broadcast %494 : f32 to vector<8x128xf32>
    %498 = arith.mulf %0, %497 : vector<8x128xf32>
    %499 = vector.broadcast %495 : f32 to vector<8x128xf32>
    %500 = arith.addf %498, %499 : vector<8x128xf32>
    %cst_43 = arith.constant 0.000000e+00 : f32
    %501 = vector.broadcast %cst_43 : f32 to vector<8x128xf32>
    %502 = arith.maximumf %500, %501 : vector<8x128xf32>
    %503 = vector.broadcast %496 : f32 to vector<8x128xf32>
    %504 = arith.mulf %502, %503 : vector<8x128xf32>
    %505 = arith.addf %493, %504 : vector<8x128xf32>
    %c42 = arith.constant 42 : index
    %506 = memref.load %arg1[%c42] : memref<193xf32, #tpu.memory_space<smem>>
    %c106 = arith.constant 106 : index
    %507 = memref.load %arg1[%c106] : memref<193xf32, #tpu.memory_space<smem>>
    %c170 = arith.constant 170 : index
    %508 = memref.load %arg1[%c170] : memref<193xf32, #tpu.memory_space<smem>>
    %509 = vector.broadcast %506 : f32 to vector<8x128xf32>
    %510 = arith.mulf %0, %509 : vector<8x128xf32>
    %511 = vector.broadcast %507 : f32 to vector<8x128xf32>
    %512 = arith.addf %510, %511 : vector<8x128xf32>
    %cst_44 = arith.constant 0.000000e+00 : f32
    %513 = vector.broadcast %cst_44 : f32 to vector<8x128xf32>
    %514 = arith.maximumf %512, %513 : vector<8x128xf32>
    %515 = vector.broadcast %508 : f32 to vector<8x128xf32>
    %516 = arith.mulf %514, %515 : vector<8x128xf32>
    %517 = arith.addf %505, %516 : vector<8x128xf32>
    %c43 = arith.constant 43 : index
    %518 = memref.load %arg1[%c43] : memref<193xf32, #tpu.memory_space<smem>>
    %c107 = arith.constant 107 : index
    %519 = memref.load %arg1[%c107] : memref<193xf32, #tpu.memory_space<smem>>
    %c171 = arith.constant 171 : index
    %520 = memref.load %arg1[%c171] : memref<193xf32, #tpu.memory_space<smem>>
    %521 = vector.broadcast %518 : f32 to vector<8x128xf32>
    %522 = arith.mulf %0, %521 : vector<8x128xf32>
    %523 = vector.broadcast %519 : f32 to vector<8x128xf32>
    %524 = arith.addf %522, %523 : vector<8x128xf32>
    %cst_45 = arith.constant 0.000000e+00 : f32
    %525 = vector.broadcast %cst_45 : f32 to vector<8x128xf32>
    %526 = arith.maximumf %524, %525 : vector<8x128xf32>
    %527 = vector.broadcast %520 : f32 to vector<8x128xf32>
    %528 = arith.mulf %526, %527 : vector<8x128xf32>
    %529 = arith.addf %517, %528 : vector<8x128xf32>
    %c44 = arith.constant 44 : index
    %530 = memref.load %arg1[%c44] : memref<193xf32, #tpu.memory_space<smem>>
    %c108 = arith.constant 108 : index
    %531 = memref.load %arg1[%c108] : memref<193xf32, #tpu.memory_space<smem>>
    %c172 = arith.constant 172 : index
    %532 = memref.load %arg1[%c172] : memref<193xf32, #tpu.memory_space<smem>>
    %533 = vector.broadcast %530 : f32 to vector<8x128xf32>
    %534 = arith.mulf %0, %533 : vector<8x128xf32>
    %535 = vector.broadcast %531 : f32 to vector<8x128xf32>
    %536 = arith.addf %534, %535 : vector<8x128xf32>
    %cst_46 = arith.constant 0.000000e+00 : f32
    %537 = vector.broadcast %cst_46 : f32 to vector<8x128xf32>
    %538 = arith.maximumf %536, %537 : vector<8x128xf32>
    %539 = vector.broadcast %532 : f32 to vector<8x128xf32>
    %540 = arith.mulf %538, %539 : vector<8x128xf32>
    %541 = arith.addf %529, %540 : vector<8x128xf32>
    %c45 = arith.constant 45 : index
    %542 = memref.load %arg1[%c45] : memref<193xf32, #tpu.memory_space<smem>>
    %c109 = arith.constant 109 : index
    %543 = memref.load %arg1[%c109] : memref<193xf32, #tpu.memory_space<smem>>
    %c173 = arith.constant 173 : index
    %544 = memref.load %arg1[%c173] : memref<193xf32, #tpu.memory_space<smem>>
    %545 = vector.broadcast %542 : f32 to vector<8x128xf32>
    %546 = arith.mulf %0, %545 : vector<8x128xf32>
    %547 = vector.broadcast %543 : f32 to vector<8x128xf32>
    %548 = arith.addf %546, %547 : vector<8x128xf32>
    %cst_47 = arith.constant 0.000000e+00 : f32
    %549 = vector.broadcast %cst_47 : f32 to vector<8x128xf32>
    %550 = arith.maximumf %548, %549 : vector<8x128xf32>
    %551 = vector.broadcast %544 : f32 to vector<8x128xf32>
    %552 = arith.mulf %550, %551 : vector<8x128xf32>
    %553 = arith.addf %541, %552 : vector<8x128xf32>
    %c46 = arith.constant 46 : index
    %554 = memref.load %arg1[%c46] : memref<193xf32, #tpu.memory_space<smem>>
    %c110 = arith.constant 110 : index
    %555 = memref.load %arg1[%c110] : memref<193xf32, #tpu.memory_space<smem>>
    %c174 = arith.constant 174 : index
    %556 = memref.load %arg1[%c174] : memref<193xf32, #tpu.memory_space<smem>>
    %557 = vector.broadcast %554 : f32 to vector<8x128xf32>
    %558 = arith.mulf %0, %557 : vector<8x128xf32>
    %559 = vector.broadcast %555 : f32 to vector<8x128xf32>
    %560 = arith.addf %558, %559 : vector<8x128xf32>
    %cst_48 = arith.constant 0.000000e+00 : f32
    %561 = vector.broadcast %cst_48 : f32 to vector<8x128xf32>
    %562 = arith.maximumf %560, %561 : vector<8x128xf32>
    %563 = vector.broadcast %556 : f32 to vector<8x128xf32>
    %564 = arith.mulf %562, %563 : vector<8x128xf32>
    %565 = arith.addf %553, %564 : vector<8x128xf32>
    %c47 = arith.constant 47 : index
    %566 = memref.load %arg1[%c47] : memref<193xf32, #tpu.memory_space<smem>>
    %c111 = arith.constant 111 : index
    %567 = memref.load %arg1[%c111] : memref<193xf32, #tpu.memory_space<smem>>
    %c175 = arith.constant 175 : index
    %568 = memref.load %arg1[%c175] : memref<193xf32, #tpu.memory_space<smem>>
    %569 = vector.broadcast %566 : f32 to vector<8x128xf32>
    %570 = arith.mulf %0, %569 : vector<8x128xf32>
    %571 = vector.broadcast %567 : f32 to vector<8x128xf32>
    %572 = arith.addf %570, %571 : vector<8x128xf32>
    %cst_49 = arith.constant 0.000000e+00 : f32
    %573 = vector.broadcast %cst_49 : f32 to vector<8x128xf32>
    %574 = arith.maximumf %572, %573 : vector<8x128xf32>
    %575 = vector.broadcast %568 : f32 to vector<8x128xf32>
    %576 = arith.mulf %574, %575 : vector<8x128xf32>
    %577 = arith.addf %565, %576 : vector<8x128xf32>
    %c48 = arith.constant 48 : index
    %578 = memref.load %arg1[%c48] : memref<193xf32, #tpu.memory_space<smem>>
    %c112 = arith.constant 112 : index
    %579 = memref.load %arg1[%c112] : memref<193xf32, #tpu.memory_space<smem>>
    %c176 = arith.constant 176 : index
    %580 = memref.load %arg1[%c176] : memref<193xf32, #tpu.memory_space<smem>>
    %581 = vector.broadcast %578 : f32 to vector<8x128xf32>
    %582 = arith.mulf %0, %581 : vector<8x128xf32>
    %583 = vector.broadcast %579 : f32 to vector<8x128xf32>
    %584 = arith.addf %582, %583 : vector<8x128xf32>
    %cst_50 = arith.constant 0.000000e+00 : f32
    %585 = vector.broadcast %cst_50 : f32 to vector<8x128xf32>
    %586 = arith.maximumf %584, %585 : vector<8x128xf32>
    %587 = vector.broadcast %580 : f32 to vector<8x128xf32>
    %588 = arith.mulf %586, %587 : vector<8x128xf32>
    %589 = arith.addf %577, %588 : vector<8x128xf32>
    %c49 = arith.constant 49 : index
    %590 = memref.load %arg1[%c49] : memref<193xf32, #tpu.memory_space<smem>>
    %c113 = arith.constant 113 : index
    %591 = memref.load %arg1[%c113] : memref<193xf32, #tpu.memory_space<smem>>
    %c177 = arith.constant 177 : index
    %592 = memref.load %arg1[%c177] : memref<193xf32, #tpu.memory_space<smem>>
    %593 = vector.broadcast %590 : f32 to vector<8x128xf32>
    %594 = arith.mulf %0, %593 : vector<8x128xf32>
    %595 = vector.broadcast %591 : f32 to vector<8x128xf32>
    %596 = arith.addf %594, %595 : vector<8x128xf32>
    %cst_51 = arith.constant 0.000000e+00 : f32
    %597 = vector.broadcast %cst_51 : f32 to vector<8x128xf32>
    %598 = arith.maximumf %596, %597 : vector<8x128xf32>
    %599 = vector.broadcast %592 : f32 to vector<8x128xf32>
    %600 = arith.mulf %598, %599 : vector<8x128xf32>
    %601 = arith.addf %589, %600 : vector<8x128xf32>
    %c50 = arith.constant 50 : index
    %602 = memref.load %arg1[%c50] : memref<193xf32, #tpu.memory_space<smem>>
    %c114 = arith.constant 114 : index
    %603 = memref.load %arg1[%c114] : memref<193xf32, #tpu.memory_space<smem>>
    %c178 = arith.constant 178 : index
    %604 = memref.load %arg1[%c178] : memref<193xf32, #tpu.memory_space<smem>>
    %605 = vector.broadcast %602 : f32 to vector<8x128xf32>
    %606 = arith.mulf %0, %605 : vector<8x128xf32>
    %607 = vector.broadcast %603 : f32 to vector<8x128xf32>
    %608 = arith.addf %606, %607 : vector<8x128xf32>
    %cst_52 = arith.constant 0.000000e+00 : f32
    %609 = vector.broadcast %cst_52 : f32 to vector<8x128xf32>
    %610 = arith.maximumf %608, %609 : vector<8x128xf32>
    %611 = vector.broadcast %604 : f32 to vector<8x128xf32>
    %612 = arith.mulf %610, %611 : vector<8x128xf32>
    %613 = arith.addf %601, %612 : vector<8x128xf32>
    %c51 = arith.constant 51 : index
    %614 = memref.load %arg1[%c51] : memref<193xf32, #tpu.memory_space<smem>>
    %c115 = arith.constant 115 : index
    %615 = memref.load %arg1[%c115] : memref<193xf32, #tpu.memory_space<smem>>
    %c179 = arith.constant 179 : index
    %616 = memref.load %arg1[%c179] : memref<193xf32, #tpu.memory_space<smem>>
    %617 = vector.broadcast %614 : f32 to vector<8x128xf32>
    %618 = arith.mulf %0, %617 : vector<8x128xf32>
    %619 = vector.broadcast %615 : f32 to vector<8x128xf32>
    %620 = arith.addf %618, %619 : vector<8x128xf32>
    %cst_53 = arith.constant 0.000000e+00 : f32
    %621 = vector.broadcast %cst_53 : f32 to vector<8x128xf32>
    %622 = arith.maximumf %620, %621 : vector<8x128xf32>
    %623 = vector.broadcast %616 : f32 to vector<8x128xf32>
    %624 = arith.mulf %622, %623 : vector<8x128xf32>
    %625 = arith.addf %613, %624 : vector<8x128xf32>
    %c52 = arith.constant 52 : index
    %626 = memref.load %arg1[%c52] : memref<193xf32, #tpu.memory_space<smem>>
    %c116 = arith.constant 116 : index
    %627 = memref.load %arg1[%c116] : memref<193xf32, #tpu.memory_space<smem>>
    %c180 = arith.constant 180 : index
    %628 = memref.load %arg1[%c180] : memref<193xf32, #tpu.memory_space<smem>>
    %629 = vector.broadcast %626 : f32 to vector<8x128xf32>
    %630 = arith.mulf %0, %629 : vector<8x128xf32>
    %631 = vector.broadcast %627 : f32 to vector<8x128xf32>
    %632 = arith.addf %630, %631 : vector<8x128xf32>
    %cst_54 = arith.constant 0.000000e+00 : f32
    %633 = vector.broadcast %cst_54 : f32 to vector<8x128xf32>
    %634 = arith.maximumf %632, %633 : vector<8x128xf32>
    %635 = vector.broadcast %628 : f32 to vector<8x128xf32>
    %636 = arith.mulf %634, %635 : vector<8x128xf32>
    %637 = arith.addf %625, %636 : vector<8x128xf32>
    %c53 = arith.constant 53 : index
    %638 = memref.load %arg1[%c53] : memref<193xf32, #tpu.memory_space<smem>>
    %c117 = arith.constant 117 : index
    %639 = memref.load %arg1[%c117] : memref<193xf32, #tpu.memory_space<smem>>
    %c181 = arith.constant 181 : index
    %640 = memref.load %arg1[%c181] : memref<193xf32, #tpu.memory_space<smem>>
    %641 = vector.broadcast %638 : f32 to vector<8x128xf32>
    %642 = arith.mulf %0, %641 : vector<8x128xf32>
    %643 = vector.broadcast %639 : f32 to vector<8x128xf32>
    %644 = arith.addf %642, %643 : vector<8x128xf32>
    %cst_55 = arith.constant 0.000000e+00 : f32
    %645 = vector.broadcast %cst_55 : f32 to vector<8x128xf32>
    %646 = arith.maximumf %644, %645 : vector<8x128xf32>
    %647 = vector.broadcast %640 : f32 to vector<8x128xf32>
    %648 = arith.mulf %646, %647 : vector<8x128xf32>
    %649 = arith.addf %637, %648 : vector<8x128xf32>
    %c54 = arith.constant 54 : index
    %650 = memref.load %arg1[%c54] : memref<193xf32, #tpu.memory_space<smem>>
    %c118 = arith.constant 118 : index
    %651 = memref.load %arg1[%c118] : memref<193xf32, #tpu.memory_space<smem>>
    %c182 = arith.constant 182 : index
    %652 = memref.load %arg1[%c182] : memref<193xf32, #tpu.memory_space<smem>>
    %653 = vector.broadcast %650 : f32 to vector<8x128xf32>
    %654 = arith.mulf %0, %653 : vector<8x128xf32>
    %655 = vector.broadcast %651 : f32 to vector<8x128xf32>
    %656 = arith.addf %654, %655 : vector<8x128xf32>
    %cst_56 = arith.constant 0.000000e+00 : f32
    %657 = vector.broadcast %cst_56 : f32 to vector<8x128xf32>
    %658 = arith.maximumf %656, %657 : vector<8x128xf32>
    %659 = vector.broadcast %652 : f32 to vector<8x128xf32>
    %660 = arith.mulf %658, %659 : vector<8x128xf32>
    %661 = arith.addf %649, %660 : vector<8x128xf32>
    %c55 = arith.constant 55 : index
    %662 = memref.load %arg1[%c55] : memref<193xf32, #tpu.memory_space<smem>>
    %c119 = arith.constant 119 : index
    %663 = memref.load %arg1[%c119] : memref<193xf32, #tpu.memory_space<smem>>
    %c183 = arith.constant 183 : index
    %664 = memref.load %arg1[%c183] : memref<193xf32, #tpu.memory_space<smem>>
    %665 = vector.broadcast %662 : f32 to vector<8x128xf32>
    %666 = arith.mulf %0, %665 : vector<8x128xf32>
    %667 = vector.broadcast %663 : f32 to vector<8x128xf32>
    %668 = arith.addf %666, %667 : vector<8x128xf32>
    %cst_57 = arith.constant 0.000000e+00 : f32
    %669 = vector.broadcast %cst_57 : f32 to vector<8x128xf32>
    %670 = arith.maximumf %668, %669 : vector<8x128xf32>
    %671 = vector.broadcast %664 : f32 to vector<8x128xf32>
    %672 = arith.mulf %670, %671 : vector<8x128xf32>
    %673 = arith.addf %661, %672 : vector<8x128xf32>
    %c56 = arith.constant 56 : index
    %674 = memref.load %arg1[%c56] : memref<193xf32, #tpu.memory_space<smem>>
    %c120 = arith.constant 120 : index
    %675 = memref.load %arg1[%c120] : memref<193xf32, #tpu.memory_space<smem>>
    %c184 = arith.constant 184 : index
    %676 = memref.load %arg1[%c184] : memref<193xf32, #tpu.memory_space<smem>>
    %677 = vector.broadcast %674 : f32 to vector<8x128xf32>
    %678 = arith.mulf %0, %677 : vector<8x128xf32>
    %679 = vector.broadcast %675 : f32 to vector<8x128xf32>
    %680 = arith.addf %678, %679 : vector<8x128xf32>
    %cst_58 = arith.constant 0.000000e+00 : f32
    %681 = vector.broadcast %cst_58 : f32 to vector<8x128xf32>
    %682 = arith.maximumf %680, %681 : vector<8x128xf32>
    %683 = vector.broadcast %676 : f32 to vector<8x128xf32>
    %684 = arith.mulf %682, %683 : vector<8x128xf32>
    %685 = arith.addf %673, %684 : vector<8x128xf32>
    %c57 = arith.constant 57 : index
    %686 = memref.load %arg1[%c57] : memref<193xf32, #tpu.memory_space<smem>>
    %c121 = arith.constant 121 : index
    %687 = memref.load %arg1[%c121] : memref<193xf32, #tpu.memory_space<smem>>
    %c185 = arith.constant 185 : index
    %688 = memref.load %arg1[%c185] : memref<193xf32, #tpu.memory_space<smem>>
    %689 = vector.broadcast %686 : f32 to vector<8x128xf32>
    %690 = arith.mulf %0, %689 : vector<8x128xf32>
    %691 = vector.broadcast %687 : f32 to vector<8x128xf32>
    %692 = arith.addf %690, %691 : vector<8x128xf32>
    %cst_59 = arith.constant 0.000000e+00 : f32
    %693 = vector.broadcast %cst_59 : f32 to vector<8x128xf32>
    %694 = arith.maximumf %692, %693 : vector<8x128xf32>
    %695 = vector.broadcast %688 : f32 to vector<8x128xf32>
    %696 = arith.mulf %694, %695 : vector<8x128xf32>
    %697 = arith.addf %685, %696 : vector<8x128xf32>
    %c58 = arith.constant 58 : index
    %698 = memref.load %arg1[%c58] : memref<193xf32, #tpu.memory_space<smem>>
    %c122 = arith.constant 122 : index
    %699 = memref.load %arg1[%c122] : memref<193xf32, #tpu.memory_space<smem>>
    %c186 = arith.constant 186 : index
    %700 = memref.load %arg1[%c186] : memref<193xf32, #tpu.memory_space<smem>>
    %701 = vector.broadcast %698 : f32 to vector<8x128xf32>
    %702 = arith.mulf %0, %701 : vector<8x128xf32>
    %703 = vector.broadcast %699 : f32 to vector<8x128xf32>
    %704 = arith.addf %702, %703 : vector<8x128xf32>
    %cst_60 = arith.constant 0.000000e+00 : f32
    %705 = vector.broadcast %cst_60 : f32 to vector<8x128xf32>
    %706 = arith.maximumf %704, %705 : vector<8x128xf32>
    %707 = vector.broadcast %700 : f32 to vector<8x128xf32>
    %708 = arith.mulf %706, %707 : vector<8x128xf32>
    %709 = arith.addf %697, %708 : vector<8x128xf32>
    %c59 = arith.constant 59 : index
    %710 = memref.load %arg1[%c59] : memref<193xf32, #tpu.memory_space<smem>>
    %c123 = arith.constant 123 : index
    %711 = memref.load %arg1[%c123] : memref<193xf32, #tpu.memory_space<smem>>
    %c187 = arith.constant 187 : index
    %712 = memref.load %arg1[%c187] : memref<193xf32, #tpu.memory_space<smem>>
    %713 = vector.broadcast %710 : f32 to vector<8x128xf32>
    %714 = arith.mulf %0, %713 : vector<8x128xf32>
    %715 = vector.broadcast %711 : f32 to vector<8x128xf32>
    %716 = arith.addf %714, %715 : vector<8x128xf32>
    %cst_61 = arith.constant 0.000000e+00 : f32
    %717 = vector.broadcast %cst_61 : f32 to vector<8x128xf32>
    %718 = arith.maximumf %716, %717 : vector<8x128xf32>
    %719 = vector.broadcast %712 : f32 to vector<8x128xf32>
    %720 = arith.mulf %718, %719 : vector<8x128xf32>
    %721 = arith.addf %709, %720 : vector<8x128xf32>
    %c60 = arith.constant 60 : index
    %722 = memref.load %arg1[%c60] : memref<193xf32, #tpu.memory_space<smem>>
    %c124 = arith.constant 124 : index
    %723 = memref.load %arg1[%c124] : memref<193xf32, #tpu.memory_space<smem>>
    %c188 = arith.constant 188 : index
    %724 = memref.load %arg1[%c188] : memref<193xf32, #tpu.memory_space<smem>>
    %725 = vector.broadcast %722 : f32 to vector<8x128xf32>
    %726 = arith.mulf %0, %725 : vector<8x128xf32>
    %727 = vector.broadcast %723 : f32 to vector<8x128xf32>
    %728 = arith.addf %726, %727 : vector<8x128xf32>
    %cst_62 = arith.constant 0.000000e+00 : f32
    %729 = vector.broadcast %cst_62 : f32 to vector<8x128xf32>
    %730 = arith.maximumf %728, %729 : vector<8x128xf32>
    %731 = vector.broadcast %724 : f32 to vector<8x128xf32>
    %732 = arith.mulf %730, %731 : vector<8x128xf32>
    %733 = arith.addf %721, %732 : vector<8x128xf32>
    %c61 = arith.constant 61 : index
    %734 = memref.load %arg1[%c61] : memref<193xf32, #tpu.memory_space<smem>>
    %c125 = arith.constant 125 : index
    %735 = memref.load %arg1[%c125] : memref<193xf32, #tpu.memory_space<smem>>
    %c189 = arith.constant 189 : index
    %736 = memref.load %arg1[%c189] : memref<193xf32, #tpu.memory_space<smem>>
    %737 = vector.broadcast %734 : f32 to vector<8x128xf32>
    %738 = arith.mulf %0, %737 : vector<8x128xf32>
    %739 = vector.broadcast %735 : f32 to vector<8x128xf32>
    %740 = arith.addf %738, %739 : vector<8x128xf32>
    %cst_63 = arith.constant 0.000000e+00 : f32
    %741 = vector.broadcast %cst_63 : f32 to vector<8x128xf32>
    %742 = arith.maximumf %740, %741 : vector<8x128xf32>
    %743 = vector.broadcast %736 : f32 to vector<8x128xf32>
    %744 = arith.mulf %742, %743 : vector<8x128xf32>
    %745 = arith.addf %733, %744 : vector<8x128xf32>
    %c62 = arith.constant 62 : index
    %746 = memref.load %arg1[%c62] : memref<193xf32, #tpu.memory_space<smem>>
    %c126 = arith.constant 126 : index
    %747 = memref.load %arg1[%c126] : memref<193xf32, #tpu.memory_space<smem>>
    %c190 = arith.constant 190 : index
    %748 = memref.load %arg1[%c190] : memref<193xf32, #tpu.memory_space<smem>>
    %749 = vector.broadcast %746 : f32 to vector<8x128xf32>
    %750 = arith.mulf %0, %749 : vector<8x128xf32>
    %751 = vector.broadcast %747 : f32 to vector<8x128xf32>
    %752 = arith.addf %750, %751 : vector<8x128xf32>
    %cst_64 = arith.constant 0.000000e+00 : f32
    %753 = vector.broadcast %cst_64 : f32 to vector<8x128xf32>
    %754 = arith.maximumf %752, %753 : vector<8x128xf32>
    %755 = vector.broadcast %748 : f32 to vector<8x128xf32>
    %756 = arith.mulf %754, %755 : vector<8x128xf32>
    %757 = arith.addf %745, %756 : vector<8x128xf32>
    %c63 = arith.constant 63 : index
    %758 = memref.load %arg1[%c63] : memref<193xf32, #tpu.memory_space<smem>>
    %c127 = arith.constant 127 : index
    %759 = memref.load %arg1[%c127] : memref<193xf32, #tpu.memory_space<smem>>
    %c191 = arith.constant 191 : index
    %760 = memref.load %arg1[%c191] : memref<193xf32, #tpu.memory_space<smem>>
    %761 = vector.broadcast %758 : f32 to vector<8x128xf32>
    %762 = arith.mulf %0, %761 : vector<8x128xf32>
    %763 = vector.broadcast %759 : f32 to vector<8x128xf32>
    %764 = arith.addf %762, %763 : vector<8x128xf32>
    %cst_65 = arith.constant 0.000000e+00 : f32
    %765 = vector.broadcast %cst_65 : f32 to vector<8x128xf32>
    %766 = arith.maximumf %764, %765 : vector<8x128xf32>
    %767 = vector.broadcast %760 : f32 to vector<8x128xf32>
    %768 = arith.mulf %766, %767 : vector<8x128xf32>
    %769 = arith.addf %757, %768 : vector<8x128xf32>
    %c192 = arith.constant 192 : index
    %770 = memref.load %arg1[%c192] : memref<193xf32, #tpu.memory_space<smem>>
    %771 = vector.broadcast %770 : f32 to vector<8x128xf32>
    %772 = arith.addf %769, %771 : vector<8x128xf32>
    %c0_66 = arith.constant 0 : index
    %c0_67 = arith.constant 0 : index
    %773 = vector.load %arg3[%c0_66, %c0_67] : memref<8x128xf32, #tpu.memory_space<vmem>>, vector<8x128xf32>
    tpu.vector_store %arg3[%c0_66, %c0_67], %772 {strides = array<i32>} : memref<8x128xf32, #tpu.memory_space<vmem>>, vector<8x128xf32>,
    return
  }
  func.func @transform_0(%arg0: i32) -> i32 {
    %c0_i32 = arith.constant 0 : i32
    %c0_i32_0 = arith.constant 0 : i32
    return %c0_i32 : i32
  }
  func.func @transform_1(%arg0: i32) -> (i32, i32) {
    %c0_i32 = arith.constant 0 : i32
    %c0_i32_0 = arith.constant 0 : i32
    return %arg0, %c0_i32 : i32, i32
  }
  func.func @transform_2(%arg0: i32) -> (i32, i32) {
    %c0_i32 = arith.constant 0 : i32
    %c0_i32_0 = arith.constant 0 : i32
    return %arg0, %c0_i32 : i32, i32
  }
}

</mosaic_0001>

<llo_original>
// kernel: tpu_custom_call.1
$region0: #{tpu_custom_call.1}
  #allocation0 [shape = 'u32[]', space=smem, size = 0x4, offset = 0x4, fixed_abs, tag = 'smem constant byte address 0x4 - core index']
  #allocation1 [shape = 'u32[144,128]{1,0:T(1,128)}', space=vmem, size = 0x12000, scoped, tag = 'internal scratch']
  %s0 = inlined_call_operand.hbm [shape: f32[193], index: 0, kind: input, shape index: {}]
  %s1 = inlined_call_operand.hbm [shape: f32[24,128], index: 1, kind: input, shape index: {}]
  %s2 = inlined_call_operand.hbm [shape: f32[24,128], index: 2, kind: output, shape index: {}]
  %s3 = sld [smem:[#allocation0]]
  $region49: #{tpu_custom_call.1} parent=0
    _
  %s5 = ssub.s32 1, %s3
  %s6 = scalar_select 0, %s5, %s3
  $region1: #{tpu_custom_call.1} parent=0
    #allocation2 [shape = 'u8[1024]{0}', space=smem, size = 0x400, scoped, tag = 'input window, operand 0, single buffered']
    #allocation3 [shape = 's32[2]{0}', space=sflag, size = 0x8, scoped, tag = 'scoped memory for tpu_custom_call.1']
    #allocation4 [shape = 's32[2]{0}', space=sflag, size = 0x8, scoped, tag = 'scoped memory for tpu_custom_call.1']
    #allocation5 [shape = 's32[2]{0}', space=sflag, size = 0x8, scoped, tag = 'scoped memory for tpu_custom_call.1']
    #allocation6 [shape = 'u8[8192]{0}', space=vmem, size = 0x2000, scoped, tag = 'input window, operand 1']
    #allocation7 [shape = 'u8[8192]{0}', space=vmem, size = 0x2000, scoped, tag = 'output window, operand 0']
    %7 = vsyncpa [#allocation5], 0
    %8 = vsyncpa [#allocation3], 0
    %s9 = scalar_lea.sflag [#allocation3], 1
    %10 = vsyncpa %s9, 0
    %11 = vsyncpa [#allocation4], 0
    %s12 = scalar_lea.sflag [#allocation4], 1
    %13 = vsyncpa %s12, 0
    loop: start=0, step=1, limit=5
    $region2: #{tpu_custom_call.1} parent=1 // loop_pre_header
      _
    $region3: #{tpu_custom_call.1} parent=1 // loop_header
      %s15 = sphi 0, %s19
      %p16 = scmp.ge.s32.totalorder %s15, 5
      %s23 = sphi 0, %s23
      %s25 = sphi 0, %s23
      %s26 = sphi 0, %s25
      %s40 = sphi 0, %s26
      %s46 = sphi 0, %s48
      %s49 = sphi 0, %s46
      %s50 = sphi 0, %s49
      %s66 = sphi 0, %s50
      %s72 = sphi 0, %s74
      %s75 = sphi 0, %s72
      %s76 = sphi 0, %s75
      %s92 = sphi 0, %s76
    $region4: #{tpu_custom_call.1} parent=1 // loop_header_branch
      %18 = sbr.rel (%p16) target = $region8
    $region5: #{tpu_custom_call.1} parent=1 // loop_body
      %s20 = ssub.s32 %s15, 1
      %s21 = ssub.s32 %s15, 2
      %s22 = sadd.s32 %s15, 1
      %s24 = sadd.s32 %s23, 1
      %p27 = scmp.eq.s32.totalorder %s15, 2
      %p28 = scmp.ne.s32.totalorder %s23, %s25
      %p29 = scmp.eq.s32.totalorder %s15, 0
      %p30 = por %p28, %p29
      %p31 = scmp.ne.s32.totalorder %s23, %s25
      %p32 = scmp.eq.s32.totalorder %s20, 2
      %p33 = por %p31, %p32
      %p34 = scmp.ne.s32.totalorder %s25, %s26
      %p35 = scmp.eq.s32.totalorder %s20, 0
      %p36 = por %p34, %p35
      %p37 = scmp.ne.s32.totalorder %s25, %s26
      %p38 = scmp.eq.s32.totalorder %s21, 2
      %p39 = por %p37, %p38
      %p41 = scmp.ne.s32.totalorder %s26, %s40
      %p42 = scmp.eq.s32.totalorder %s21, 0
      %p43 = por %p41, %p42
      %s44 = ssub.s32 %s15, %s22
      %p45 = scmp.eq.s32.totalorder %s44, 0
      %s47 = sadd.s32 %s46, 1
      %s48 = scalar_select %p45, %s46, %s47
      %p51 = pneg %p45
      %p52 = scmp.eq.s32.totalorder %s15, 2
      %p53 = por %p51, %p52
      %p54 = scmp.ne.s32.totalorder %s46, %s49
      %p55 = scmp.eq.s32.totalorder %s15, 0
      %p56 = por %p54, %p55
      %p57 = scmp.ne.s32.totalorder %s46, %s49
      %p58 = scmp.eq.s32.totalorder %s20, 2
      %p59 = por %p57, %p58
      %p60 = scmp.ne.s32.totalorder %s49, %s50
      %p61 = scmp.eq.s32.totalorder %s20, 0
      %p62 = por %p60, %p61
      %p63 = scmp.ne.s32.totalorder %s49, %s50
      %p64 = scmp.eq.s32.totalorder %s21, 2
      %p65 = por %p63, %p64
      %p67 = scmp.ne.s32.totalorder %s50, %s66
      %p68 = scmp.eq.s32.totalorder %s21, 0
      %p69 = por %p67, %p68
      %s70 = ssub.s32 %s15, %s22
      %p71 = scmp.eq.s32.totalorder %s70, 0
      %s73 = sadd.s32 %s72, 1
      %s74 = scalar_select %p71, %s72, %s73
      %p77 = pneg %p71
      %p78 = scmp.eq.s32.totalorder %s15, 2
      %p79 = por %p77, %p78
      %p80 = scmp.ne.s32.totalorder %s72, %s75
      %p81 = scmp.eq.s32.totalorder %s15, 0
      %p82 = por %p80, %p81
      %p83 = scmp.ne.s32.totalorder %s72, %s75
      %p84 = scmp.eq.s32.totalorder %s20, 2
      %p85 = por %p83, %p84
      %p86 = scmp.ne.s32.totalorder %s75, %s76
      %p87 = scmp.eq.s32.totalorder %s20, 0
      %p88 = por %p86, %p87
      %p89 = scmp.ne.s32.totalorder %s75, %s76
      %p90 = scmp.eq.s32.totalorder %s21, 2
      %p91 = por %p89, %p90
      %p93 = scmp.ne.s32.totalorder %s76, %s92
      %p94 = scmp.eq.s32.totalorder %s21, 0
      %p95 = por %p93, %p94
      %p96 = scmp.le.s32.totalorder 1, %s15
      %p97 = scmp.lt.s32.totalorder %s15, 4
      %p98 = pnand %p96, %p97
      %p99 = pneg %p98
      // Predicated region
      $region9: #{tpu_custom_call.1} parent=5 // pred_check
        _
      $region10: #{tpu_custom_call.1} parent=5 // pred_check_branch
        %101 = sbr.rel (%p98) target = $region12
      $region11: #{tpu_custom_call.1} parent=5 // pred_region
        %s102 = ssub.s32 %s15, 1
        // Predicated region
        $region13: #{tpu_custom_call.1} parent=11 // pred_check
          %p103 = pneg %p36
        $region14: #{tpu_custom_call.1} parent=11 // pred_check_branch
          %105 = sbr.rel (%p103) target = $region16
        $region15: #{tpu_custom_call.1} parent=11 // pred_region
          %s107 = ssub.s32 32, 32
          %108 = vsyncadd [#allocation5], %s107
          %111 = dma.hbm_to_smem %s0, 32, [#allocation2], [#allocation5]
        $region16: #{tpu_custom_call.1} parent=11 // pred_fallthru
          _
      $region12: #{tpu_custom_call.1} parent=5 // pred_fallthru
        _
      %p112 = scmp.lt.s32.totalorder %s15, 3
      // Predicated region
      $region17: #{tpu_custom_call.1} parent=5 // pred_check
        %p113 = pneg %p112
      $region18: #{tpu_custom_call.1} parent=5 // pred_check_branch
        %115 = sbr.rel (%p113) target = $region20
      $region19: #{tpu_custom_call.1} parent=5 // pred_region
        // Predicated region
        $region21: #{tpu_custom_call.1} parent=19 // pred_check
          %p116 = pneg %p56
        $region22: #{tpu_custom_call.1} parent=19 // pred_check_branch
          %118 = sbr.rel (%p116) target = $region24
        $region23: #{tpu_custom_call.1} parent=19 // pred_region
          %s119 = sand.u32 %s46, 1
          %s120 = scalar_lea.sflag [#allocation3], %s119
          %s121 = sand.u32 %s46, 1
          %s122 = smul.addr %s121, 8
          %s123 = scalar_lea.vmem [#allocation6], %s122
          %s125 = ssub.s32 128, 128
          %126 = vsyncadd %s120, %s125
          %s127 = smul.addr %s15, 128
          %s128 = scalar_lea.hbm %s1, %s127
          %s130 = sshll.u32 %s123, 4
          %s131 = int_to_ptr.vmem [resolvable:$true] %s130
          %133 = dma.hbm_to_vmem [thread:$0]  %s128, 128, %s131, %s120
        $region24: #{tpu_custom_call.1} parent=19 // pred_fallthru
          _
      $region20: #{tpu_custom_call.1} parent=5 // pred_fallthru
        _
      %p134 = scmp.le.s32.totalorder 1, %s15
      %p135 = scmp.lt.s32.totalorder %s15, 4
      %p136 = pnand %p134, %p135
      %p137 = pneg %p136
      // Predicated region
      $region25: #{tpu_custom_call.1} parent=5 // pred_check
        _
      $region26: #{tpu_custom_call.1} parent=5 // pred_check_branch
        %139 = sbr.rel (%p136) target = $region28
      $region27: #{tpu_custom_call.1} parent=5 // pred_region
        %s140 = ssub.s32 %s15, 1
        // Predicated region
        $region29: #{tpu_custom_call.1} parent=27 // pred_check
          %p141 = pneg %p36
        $region30: #{tpu_custom_call.1} parent=27 // pred_check_branch
          %143 = sbr.rel (%p141) target = $region32
        $region31: #{tpu_custom_call.1} parent=27 // pred_region
          %144 = dma.done [#allocation5], 32
        $region32: #{tpu_custom_call.1} parent=27 // pred_fallthru
          _
        %s145 = sand.u32 %s49, 1
        %s146 = scalar_lea.sflag [#allocation3], %s145
        %s147 = sand.u32 %s49, 1
        %s148 = smul.addr %s147, 8
        %s149 = scalar_lea.vmem [#allocation6], %s148
        // Predicated region
        $region33: #{tpu_custom_call.1} parent=27 // pred_check
          %p150 = pneg %p62
        $region34: #{tpu_custom_call.1} parent=27 // pred_check_branch
          %152 = sbr.rel (%p150) target = $region36
        $region35: #{tpu_custom_call.1} parent=27 // pred_region
          %153 = dma.done %s146, 128
        $region36: #{tpu_custom_call.1} parent=27 // pred_fallthru
          _
        %154 = sfence
        %p155 = pneg %p36
        %p156 = pneg %p33
        %s157 = sand.u32 %s49, 1
        %s158 = scalar_lea.sflag [#allocation3], %s157
        %s159 = sand.u32 %s49, 1
        %s160 = smul.addr %s159, 8
        %s161 = scalar_lea.vmem [#allocation6], %s160
        %p162 = pneg %p62
        %p163 = pneg %p59
        %p164 = pneg %p88
        %p165 = pneg %p85
        %s166 = sand.u32 %s75, 1
        %s167 = scalar_lea.sflag [#allocation4], %s166
        %s168 = sand.u32 %s75, 1
        %s169 = smul.addr %s168, 8
        %s170 = scalar_lea.vmem [#allocation7], %s169
        %v171 = vld [vmem:[%s149] sm:$0xff]
        %s172 = sld [smem:[#allocation2]]
        %s173 = sld [smem:[#allocation2 + $0x40]]
        %s174 = sld [smem:[#allocation2 + $0x80]]
        %v175 = vstv %s172
        %v176 = vmul.f32 %v171, %v175
        %v177 = vstv %s173
        %v178 = vadd.f32 %v176, %v177
        %v179 = vmax.f32 %v178, 0.0
        %v180 = vstv %s174
        %v181 = vmul.f32 %v179, %v180
        %v182 = vadd.f32 %v181, 0.0
        %s183 = sld [smem:[#allocation2 + $0x1]]
        %s184 = sld [smem:[#allocation2 + $0x41]]
        %s185 = sld [smem:[#allocation2 + $0x81]]
        %v186 = vstv %s183
        %v187 = vmul.f32 %v171, %v186
        %v188 = vstv %s184
        %v189 = vadd.f32 %v187, %v188
        %v190 = vmax.f32 %v189, 0.0
        %v191 = vstv %s185
        %v192 = vmul.f32 %v190, %v191
        %v193 = vadd.f32 %v182, %v192
        %s194 = sld [smem:[#allocation2 + $0x2]]
        %s195 = sld [smem:[#allocation2 + $0x42]]
        %s196 = sld [smem:[#allocation2 + $0x82]]
        %v197 = vstv %s194
        %v198 = vmul.f32 %v171, %v197
        %v199 = vstv %s195
        %v200 = vadd.f32 %v198, %v199
        %v201 = vmax.f32 %v200, 0.0
        %v202 = vstv %s196
        %v203 = vmul.f32 %v201, %v202
        %v204 = vadd.f32 %v193, %v203
        %s205 = sld [smem:[#allocation2 + $0x3]]
        %s206 = sld [smem:[#allocation2 + $0x43]]
        %s207 = sld [smem:[#allocation2 + $0x83]]
        %v208 = vstv %s205
        %v209 = vmul.f32 %v171, %v208
        %v210 = vstv %s206
        %v211 = vadd.f32 %v209, %v210
        %v212 = vmax.f32 %v211, 0.0
        %v213 = vstv %s207
        %v214 = vmul.f32 %v212, %v213
        %v215 = vadd.f32 %v204, %v214
        %s216 = sld [smem:[#allocation2 + $0x4]]
        %s217 = sld [smem:[#allocation2 + $0x44]]
        %s218 = sld [smem:[#allocation2 + $0x84]]
        %v219 = vstv %s216
        %v220 = vmul.f32 %v171, %v219
        %v221 = vstv %s217
        %v222 = vadd.f32 %v220, %v221
        %v223 = vmax.f32 %v222, 0.0
        %v224 = vstv %s218
        %v225 = vmul.f32 %v223, %v224
        %v226 = vadd.f32 %v215, %v225
        %s227 = sld [smem:[#allocation2 + $0x5]]
        %s228 = sld [smem:[#allocation2 + $0x45]]
        %s229 = sld [smem:[#allocation2 + $0x85]]
        %v230 = vstv %s227
        %v231 = vmul.f32 %v171, %v230
        %v232 = vstv %s228
        %v233 = vadd.f32 %v231, %v232
        %v234 = vmax.f32 %v233, 0.0
        %v235 = vstv %s229
        %v236 = vmul.f32 %v234, %v235
        %v237 = vadd.f32 %v226, %v236
        %s238 = sld [smem:[#allocation2 + $0x6]]
        %s239 = sld [smem:[#allocation2 + $0x46]]
        %s240 = sld [smem:[#allocation2 + $0x86]]
        %v241 = vstv %s238
        %v242 = vmul.f32 %v171, %v241
        %v243 = vstv %s239
        %v244 = vadd.f32 %v242, %v243
        %v245 = vmax.f32 %v244, 0.0
        %v246 = vstv %s240
        %v247 = vmul.f32 %v245, %v246
        %v248 = vadd.f32 %v237, %v247
        %s249 = sld [smem:[#allocation2 + $0x7]]
        %s250 = sld [smem:[#allocation2 + $0x47]]
        %s251 = sld [smem:[#allocation2 + $0x87]]
        %v252 = vstv %s249
        %v253 = vmul.f32 %v171, %v252
        %v254 = vstv %s250
        %v255 = vadd.f32 %v253, %v254
        %v256 = vmax.f32 %v255, 0.0
        %v257 = vstv %s251
        %v258 = vmul.f32 %v256, %v257
        %v259 = vadd.f32 %v248, %v258
        %s260 = sld [smem:[#allocation2 + $0x8]]
        %s261 = sld [smem:[#allocation2 + $0x48]]
        %s262 = sld [smem:[#allocation2 + $0x88]]
        %v263 = vstv %s260
        %v264 = vmul.f32 %v171, %v263
        %v265 = vstv %s261
        %v266 = vadd.f32 %v264, %v265
        %v267 = vmax.f32 %v266, 0.0
        %v268 = vstv %s262
        %v269 = vmul.f32 %v267, %v268
        %v270 = vadd.f32 %v259, %v269
        %s271 = sld [smem:[#allocation2 + $0x9]]
        %s272 = sld [smem:[#allocation2 + $0x49]]
        %s273 = sld [smem:[#allocation2 + $0x89]]
        %v274 = vstv %s271
        %v275 = vmul.f32 %v171, %v274
        %v276 = vstv %s272
        %v277 = vadd.f32 %v275, %v276
        %v278 = vmax.f32 %v277, 0.0
        %v279 = vstv %s273
        %v280 = vmul.f32 %v278, %v279
        %v281 = vadd.f32 %v270, %v280
        %s282 = sld [smem:[#allocation2 + $0xa]]
        %s283 = sld [smem:[#allocation2 + $0x4a]]
        %s284 = sld [smem:[#allocation2 + $0x8a]]
        %v285 = vstv %s282
        %v286 = vmul.f32 %v171, %v285
        %v287 = vstv %s283
        %v288 = vadd.f32 %v286, %v287
        %v289 = vmax.f32 %v288, 0.0
        %v290 = vstv %s284
        %v291 = vmul.f32 %v289, %v290
        %v292 = vadd.f32 %v281, %v291
        %s293 = sld [smem:[#allocation2 + $0xb]]
        %s294 = sld [smem:[#allocation2 + $0x4b]]
        %s295 = sld [smem:[#allocation2 + $0x8b]]
        %v296 = vstv %s293
        %v297 = vmul.f32 %v171, %v296
        %v298 = vstv %s294
        %v299 = vadd.f32 %v297, %v298
        %v300 = vmax.f32 %v299, 0.0
        %v301 = vstv %s295
        %v302 = vmul.f32 %v300, %v301
        %v303 = vadd.f32 %v292, %v302
        %s304 = sld [smem:[#allocation2 + $0xc]]
        %s305 = sld [smem:[#allocation2 + $0x4c]]
        %s306 = sld [smem:[#allocation2 + $0x8c]]
        %v307 = vstv %s304
        %v308 = vmul.f32 %v171, %v307
        %v309 = vstv %s305
        %v310 = vadd.f32 %v308, %v309
        %v311 = vmax.f32 %v310, 0.0
        %v312 = vstv %s306
        %v313 = vmul.f32 %v311, %v312
        %v314 = vadd.f32 %v303, %v313
        %s315 = sld [smem:[#allocation2 + $0xd]]
        %s316 = sld [smem:[#allocation2 + $0x4d]]
        %s317 = sld [smem:[#allocation2 + $0x8d]]
        %v318 = vstv %s315
        %v319 = vmul.f32 %v171, %v318
        %v320 = vstv %s316
        %v321 = vadd.f32 %v319, %v320
        %v322 = vmax.f32 %v321, 0.0
        %v323 = vstv %s317
        %v324 = vmul.f32 %v322, %v323
        %v325 = vadd.f32 %v314, %v324
        %s326 = sld [smem:[#allocation2 + $0xe]]
        %s327 = sld [smem:[#allocation2 + $0x4e]]
        %s328 = sld [smem:[#allocation2 + $0x8e]]
        %v329 = vstv %s326
        %v330 = vmul.f32 %v171, %v329
        %v331 = vstv %s327
        %v332 = vadd.f32 %v330, %v331
        %v333 = vmax.f32 %v332, 0.0
        %v334 = vstv %s328
        %v335 = vmul.f32 %v333, %v334
        %v336 = vadd.f32 %v325, %v335
        %s337 = sld [smem:[#allocation2 + $0xf]]
        %s338 = sld [smem:[#allocation2 + $0x4f]]
        %s339 = sld [smem:[#allocation2 + $0x8f]]
        %v340 = vstv %s337
        %v341 = vmul.f32 %v171, %v340
        %v342 = vstv %s338
        %v343 = vadd.f32 %v341, %v342
        %v344 = vmax.f32 %v343, 0.0
        %v345 = vstv %s339
        %v346 = vmul.f32 %v344, %v345
        %v347 = vadd.f32 %v336, %v346
        %s348 = sld [smem:[#allocation2 + $0x10]]
        %s349 = sld [smem:[#allocation2 + $0x50]]
        %s350 = sld [smem:[#allocation2 + $0x90]]
        %v351 = vstv %s348
        %v352 = vmul.f32 %v171, %v351
        %v353 = vstv %s349
        %v354 = vadd.f32 %v352, %v353
        %v355 = vmax.f32 %v354, 0.0
        %v356 = vstv %s350
        %v357 = vmul.f32 %v355, %v356
        %v358 = vadd.f32 %v347, %v357
        %s359 = sld [smem:[#allocation2 + $0x11]]
        %s360 = sld [smem:[#allocation2 + $0x51]]
        %s361 = sld [smem:[#allocation2 + $0x91]]
        %v362 = vstv %s359
        %v363 = vmul.f32 %v171, %v362
        %v364 = vstv %s360
        %v365 = vadd.f32 %v363, %v364
        %v366 = vmax.f32 %v365, 0.0
        %v367 = vstv %s361
        %v368 = vmul.f32 %v366, %v367
        %v369 = vadd.f32 %v358, %v368
        %s370 = sld [smem:[#allocation2 + $0x12]]
        %s371 = sld [smem:[#allocation2 + $0x52]]
        %s372 = sld [smem:[#allocation2 + $0x92]]
        %v373 = vstv %s370
        %v374 = vmul.f32 %v171, %v373
        %v375 = vstv %s371
        %v376 = vadd.f32 %v374, %v375
        %v377 = vmax.f32 %v376, 0.0
        %v378 = vstv %s372
        %v379 = vmul.f32 %v377, %v378
        %v380 = vadd.f32 %v369, %v379
        %s381 = sld [smem:[#allocation2 + $0x13]]
        %s382 = sld [smem:[#allocation2 + $0x53]]
        %s383 = sld [smem:[#allocation2 + $0x93]]
        %v384 = vstv %s381
        %v385 = vmul.f32 %v171, %v384
        %v386 = vstv %s382
        %v387 = vadd.f32 %v385, %v386
        %v388 = vmax.f32 %v387, 0.0
        %v389 = vstv %s383
        %v390 = vmul.f32 %v388, %v389
        %v391 = vadd.f32 %v380, %v390
        %s392 = sld [smem:[#allocation2 + $0x14]]
        %s393 = sld [smem:[#allocation2 + $0x54]]
        %s394 = sld [smem:[#allocation2 + $0x94]]
        %v395 = vstv %s392
        %v396 = vmul.f32 %v171, %v395
        %v397 = vstv %s393
        %v398 = vadd.f32 %v396, %v397
        %v399 = vmax.f32 %v398, 0.0
        %v400 = vstv %s394
        %v401 = vmul.f32 %v399, %v400
        %v402 = vadd.f32 %v391, %v401
        %s403 = sld [smem:[#allocation2 + $0x15]]
        %s404 = sld [smem:[#allocation2 + $0x55]]
        %s405 = sld [smem:[#allocation2 + $0x95]]
        %v406 = vstv %s403
        %v407 = vmul.f32 %v171, %v406
        %v408 = vstv %s404
        %v409 = vadd.f32 %v407, %v408
        %v410 = vmax.f32 %v409, 0.0
        %v411 = vstv %s405
        %v412 = vmul.f32 %v410, %v411
        %v413 = vadd.f32 %v402, %v412
        %s414 = sld [smem:[#allocation2 + $0x16]]
        %s415 = sld [smem:[#allocation2 + $0x56]]
        %s416 = sld [smem:[#allocation2 + $0x96]]
        %v417 = vstv %s414
        %v418 = vmul.f32 %v171, %v417
        %v419 = vstv %s415
        %v420 = vadd.f32 %v418, %v419
        %v421 = vmax.f32 %v420, 0.0
        %v422 = vstv %s416
        %v423 = vmul.f32 %v421, %v422
        %v424 = vadd.f32 %v413, %v423
        %s425 = sld [smem:[#allocation2 + $0x17]]
        %s426 = sld [smem:[#allocation2 + $0x57]]
        %s427 = sld [smem:[#allocation2 + $0x97]]
        %v428 = vstv %s425
        %v429 = vmul.f32 %v171, %v428
        %v430 = vstv %s426
        %v431 = vadd.f32 %v429, %v430
        %v432 = vmax.f32 %v431, 0.0
        %v433 = vstv %s427
        %v434 = vmul.f32 %v432, %v433
        %v435 = vadd.f32 %v424, %v434
        %s436 = sld [smem:[#allocation2 + $0x18]]
        %s437 = sld [smem:[#allocation2 + $0x58]]
        %s438 = sld [smem:[#allocation2 + $0x98]]
        %v439 = vstv %s436
        %v440 = vmul.f32 %v171, %v439
        %v441 = vstv %s437
        %v442 = vadd.f32 %v440, %v441
        %v443 = vmax.f32 %v442, 0.0
        %v444 = vstv %s438
        %v445 = vmul.f32 %v443, %v444
        %v446 = vadd.f32 %v435, %v445
        %s447 = sld [smem:[#allocation2 + $0x19]]
        %s448 = sld [smem:[#allocation2 + $0x59]]
        %s449 = sld [smem:[#allocation2 + $0x99]]
        %v450 = vstv %s447
        %v451 = vmul.f32 %v171, %v450
        %v452 = vstv %s448
        %v453 = vadd.f32 %v451, %v452
        %v454 = vmax.f32 %v453, 0.0
        %v455 = vstv %s449
        %v456 = vmul.f32 %v454, %v455
        %v457 = vadd.f32 %v446, %v456
        %s458 = sld [smem:[#allocation2 + $0x1a]]
        %s459 = sld [smem:[#allocation2 + $0x5a]]
        %s460 = sld [smem:[#allocation2 + $0x9a]]
        %v461 = vstv %s458
        %v462 = vmul.f32 %v171, %v461
        %v463 = vstv %s459
        %v464 = vadd.f32 %v462, %v463
        %v465 = vmax.f32 %v464, 0.0
        %v466 = vstv %s460
        %v467 = vmul.f32 %v465, %v466
        %v468 = vadd.f32 %v457, %v467
        %s469 = sld [smem:[#allocation2 + $0x1b]]
        %s470 = sld [smem:[#allocation2 + $0x5b]]
        %s471 = sld [smem:[#allocation2 + $0x9b]]
        %v472 = vstv %s469
        %v473 = vmul.f32 %v171, %v472
        %v474 = vstv %s470
        %v475 = vadd.f32 %v473, %v474
        %v476 = vmax.f32 %v475, 0.0
        %v477 = vstv %s471
        %v478 = vmul.f32 %v476, %v477
        %v479 = vadd.f32 %v468, %v478
        %s480 = sld [smem:[#allocation2 + $0x1c]]
        %s481 = sld [smem:[#allocation2 + $0x5c]]
        %s482 = sld [smem:[#allocation2 + $0x9c]]
        %v483 = vstv %s480
        %v484 = vmul.f32 %v171, %v483
        %v485 = vstv %s481
        %v486 = vadd.f32 %v484, %v485
        %v487 = vmax.f32 %v486, 0.0
        %v488 = vstv %s482
        %v489 = vmul.f32 %v487, %v488
        %v490 = vadd.f32 %v479, %v489
        %s491 = sld [smem:[#allocation2 + $0x1d]]
        %s492 = sld [smem:[#allocation2 + $0x5d]]
        %s493 = sld [smem:[#allocation2 + $0x9d]]
        %v494 = vstv %s491
        %v495 = vmul.f32 %v171, %v494
        %v496 = vstv %s492
        %v497 = vadd.f32 %v495, %v496
        %v498 = vmax.f32 %v497, 0.0
        %v499 = vstv %s493
        %v500 = vmul.f32 %v498, %v499
        %v501 = vadd.f32 %v490, %v500
        %s502 = sld [smem:[#allocation2 + $0x1e]]
        %s503 = sld [smem:[#allocation2 + $0x5e]]
        %s504 = sld [smem:[#allocation2 + $0x9e]]
        %v505 = vstv %s502
        %v506 = vmul.f32 %v171, %v505
        %v507 = vstv %s503
        %v508 = vadd.f32 %v506, %v507
        %v509 = vmax.f32 %v508, 0.0
        %v510 = vstv %s504
        %v511 = vmul.f32 %v509, %v510
        %v512 = vadd.f32 %v501, %v511
        %s513 = sld [smem:[#allocation2 + $0x1f]]
        %s514 = sld [smem:[#allocation2 + $0x5f]]
        %s515 = sld [smem:[#allocation2 + $0x9f]]
        %v516 = vstv %s513
        %v517 = vmul.f32 %v171, %v516
        %v518 = vstv %s514
        %v519 = vadd.f32 %v517, %v518
        %v520 = vmax.f32 %v519, 0.0
        %v521 = vstv %s515
        %v522 = vmul.f32 %v520, %v521
        %v523 = vadd.f32 %v512, %v522
        %s524 = sld [smem:[#allocation2 + $0x20]]
        %s525 = sld [smem:[#allocation2 + $0x60]]
        %s526 = sld [smem:[#allocation2 + $0xa0]]
        %v527 = vstv %s524
        %v528 = vmul.f32 %v171, %v527
        %v529 = vstv %s525
        %v530 = vadd.f32 %v528, %v529
        %v531 = vmax.f32 %v530, 0.0
        %v532 = vstv %s526
        %v533 = vmul.f32 %v531, %v532
        %v534 = vadd.f32 %v523, %v533
        %s535 = sld [smem:[#allocation2 + $0x21]]
        %s536 = sld [smem:[#allocation2 + $0x61]]
        %s537 = sld [smem:[#allocation2 + $0xa1]]
        %v538 = vstv %s535
        %v539 = vmul.f32 %v171, %v538
        %v540 = vstv %s536
        %v541 = vadd.f32 %v539, %v540
        %v542 = vmax.f32 %v541, 0.0
        %v543 = vstv %s537
        %v544 = vmul.f32 %v542, %v543
        %v545 = vadd.f32 %v534, %v544
        %s546 = sld [smem:[#allocation2 + $0x22]]
        %s547 = sld [smem:[#allocation2 + $0x62]]
        %s548 = sld [smem:[#allocation2 + $0xa2]]
        %v549 = vstv %s546
        %v550 = vmul.f32 %v171, %v549
        %v551 = vstv %s547
        %v552 = vadd.f32 %v550, %v551
        %v553 = vmax.f32 %v552, 0.0
        %v554 = vstv %s548
        %v555 = vmul.f32 %v553, %v554
        %v556 = vadd.f32 %v545, %v555
        %s557 = sld [smem:[#allocation2 + $0x23]]
        %s558 = sld [smem:[#allocation2 + $0x63]]
        %s559 = sld [smem:[#allocation2 + $0xa3]]
        %v560 = vstv %s557
        %v561 = vmul.f32 %v171, %v560
        %v562 = vstv %s558
        %v563 = vadd.f32 %v561, %v562
        %v564 = vmax.f32 %v563, 0.0
        %v565 = vstv %s559
        %v566 = vmul.f32 %v564, %v565
        %v567 = vadd.f32 %v556, %v566
        %s568 = sld [smem:[#allocation2 + $0x24]]
        %s569 = sld [smem:[#allocation2 + $0x64]]
        %s570 = sld [smem:[#allocation2 + $0xa4]]
        %v571 = vstv %s568
        %v572 = vmul.f32 %v171, %v571
        %v573 = vstv %s569
        %v574 = vadd.f32 %v572, %v573
        %v575 = vmax.f32 %v574, 0.0
        %v576 = vstv %s570
        %v577 = vmul.f32 %v575, %v576
        %v578 = vadd.f32 %v567, %v577
        %s579 = sld [smem:[#allocation2 + $0x25]]
        %s580 = sld [smem:[#allocation2 + $0x65]]
        %s581 = sld [smem:[#allocation2 + $0xa5]]
        %v582 = vstv %s579
        %v583 = vmul.f32 %v171, %v582
        %v584 = vstv %s580
        %v585 = vadd.f32 %v583, %v584
        %v586 = vmax.f32 %v585, 0.0
        %v587 = vstv %s581
        %v588 = vmul.f32 %v586, %v587
        %v589 = vadd.f32 %v578, %v588
        %s590 = sld [smem:[#allocation2 + $0x26]]
        %s591 = sld [smem:[#allocation2 + $0x66]]
        %s592 = sld [smem:[#allocation2 + $0xa6]]
        %v593 = vstv %s590
        %v594 = vmul.f32 %v171, %v593
        %v595 = vstv %s591
        %v596 = vadd.f32 %v594, %v595
        %v597 = vmax.f32 %v596, 0.0
        %v598 = vstv %s592
        %v599 = vmul.f32 %v597, %v598
        %v600 = vadd.f32 %v589, %v599
        %s601 = sld [smem:[#allocation2 + $0x27]]
        %s602 = sld [smem:[#allocation2 + $0x67]]
        %s603 = sld [smem:[#allocation2 + $0xa7]]
        %v604 = vstv %s601
        %v605 = vmul.f32 %v171, %v604
        %v606 = vstv %s602
        %v607 = vadd.f32 %v605, %v606
        %v608 = vmax.f32 %v607, 0.0
        %v609 = vstv %s603
        %v610 = vmul.f32 %v608, %v609
        %v611 = vadd.f32 %v600, %v610
        %s612 = sld [smem:[#allocation2 + $0x28]]
        %s613 = sld [smem:[#allocation2 + $0x68]]
        %s614 = sld [smem:[#allocation2 + $0xa8]]
        %v615 = vstv %s612
        %v616 = vmul.f32 %v171, %v615
        %v617 = vstv %s613
        %v618 = vadd.f32 %v616, %v617
        %v619 = vmax.f32 %v618, 0.0
        %v620 = vstv %s614
        %v621 = vmul.f32 %v619, %v620
        %v622 = vadd.f32 %v611, %v621
        %s623 = sld [smem:[#allocation2 + $0x29]]
        %s624 = sld [smem:[#allocation2 + $0x69]]
        %s625 = sld [smem:[#allocation2 + $0xa9]]
        %v626 = vstv %s623
        %v627 = vmul.f32 %v171, %v626
        %v628 = vstv %s624
        %v629 = vadd.f32 %v627, %v628
        %v630 = vmax.f32 %v629, 0.0
        %v631 = vstv %s625
        %v632 = vmul.f32 %v630, %v631
        %v633 = vadd.f32 %v622, %v632
        %s634 = sld [smem:[#allocation2 + $0x2a]]
        %s635 = sld [smem:[#allocation2 + $0x6a]]
        %s636 = sld [smem:[#allocation2 + $0xaa]]
        %v637 = vstv %s634
        %v638 = vmul.f32 %v171, %v637
        %v639 = vstv %s635
        %v640 = vadd.f32 %v638, %v639
        %v641 = vmax.f32 %v640, 0.0
        %v642 = vstv %s636
        %v643 = vmul.f32 %v641, %v642
        %v644 = vadd.f32 %v633, %v643
        %s645 = sld [smem:[#allocation2 + $0x2b]]
        %s646 = sld [smem:[#allocation2 + $0x6b]]
        %s647 = sld [smem:[#allocation2 + $0xab]]
        %v648 = vstv %s645
        %v649 = vmul.f32 %v171, %v648
        %v650 = vstv %s646
        %v651 = vadd.f32 %v649, %v650
        %v652 = vmax.f32 %v651, 0.0
        %v653 = vstv %s647
        %v654 = vmul.f32 %v652, %v653
        %v655 = vadd.f32 %v644, %v654
        %s656 = sld [smem:[#allocation2 + $0x2c]]
        %s657 = sld [smem:[#allocation2 + $0x6c]]
        %s658 = sld [smem:[#allocation2 + $0xac]]
        %v659 = vstv %s656
        %v660 = vmul.f32 %v171, %v659
        %v661 = vstv %s657
        %v662 = vadd.f32 %v660, %v661
        %v663 = vmax.f32 %v662, 0.0
        %v664 = vstv %s658
        %v665 = vmul.f32 %v663, %v664
        %v666 = vadd.f32 %v655, %v665
        %s667 = sld [smem:[#allocation2 + $0x2d]]
        %s668 = sld [smem:[#allocation2 + $0x6d]]
        %s669 = sld [smem:[#allocation2 + $0xad]]
        %v670 = vstv %s667
        %v671 = vmul.f32 %v171, %v670
        %v672 = vstv %s668
        %v673 = vadd.f32 %v671, %v672
        %v674 = vmax.f32 %v673, 0.0
        %v675 = vstv %s669
        %v676 = vmul.f32 %v674, %v675
        %v677 = vadd.f32 %v666, %v676
        %s678 = sld [smem:[#allocation2 + $0x2e]]
        %s679 = sld [smem:[#allocation2 + $0x6e]]
        %s680 = sld [smem:[#allocation2 + $0xae]]
        %v681 = vstv %s678
        %v682 = vmul.f32 %v171, %v681
        %v683 = vstv %s679
        %v684 = vadd.f32 %v682, %v683
        %v685 = vmax.f32 %v684, 0.0
        %v686 = vstv %s680
        %v687 = vmul.f32 %v685, %v686
        %v688 = vadd.f32 %v677, %v687
        %s689 = sld [smem:[#allocation2 + $0x2f]]
        %s690 = sld [smem:[#allocation2 + $0x6f]]
        %s691 = sld [smem:[#allocation2 + $0xaf]]
        %v692 = vstv %s689
        %v693 = vmul.f32 %v171, %v692
        %v694 = vstv %s690
        %v695 = vadd.f32 %v693, %v694
        %v696 = vmax.f32 %v695, 0.0
        %v697 = vstv %s691
        %v698 = vmul.f32 %v696, %v697
        %v699 = vadd.f32 %v688, %v698
        %s700 = sld [smem:[#allocation2 + $0x30]]
        %s701 = sld [smem:[#allocation2 + $0x70]]
        %s702 = sld [smem:[#allocation2 + $0xb0]]
        %v703 = vstv %s700
        %v704 = vmul.f32 %v171, %v703
        %v705 = vstv %s701
        %v706 = vadd.f32 %v704, %v705
        %v707 = vmax.f32 %v706, 0.0
        %v708 = vstv %s702
        %v709 = vmul.f32 %v707, %v708
        %v710 = vadd.f32 %v699, %v709
        %s711 = sld [smem:[#allocation2 + $0x31]]
        %s712 = sld [smem:[#allocation2 + $0x71]]
        %s713 = sld [smem:[#allocation2 + $0xb1]]
        %v714 = vstv %s711
        %v715 = vmul.f32 %v171, %v714
        %v716 = vstv %s712
        %v717 = vadd.f32 %v715, %v716
        %v718 = vmax.f32 %v717, 0.0
        %v719 = vstv %s713
        %v720 = vmul.f32 %v718, %v719
        %v721 = vadd.f32 %v710, %v720
        %s722 = sld [smem:[#allocation2 + $0x32]]
        %s723 = sld [smem:[#allocation2 + $0x72]]
        %s724 = sld [smem:[#allocation2 + $0xb2]]
        %v725 = vstv %s722
        %v726 = vmul.f32 %v171, %v725
        %v727 = vstv %s723
        %v728 = vadd.f32 %v726, %v727
        %v729 = vmax.f32 %v728, 0.0
        %v730 = vstv %s724
        %v731 = vmul.f32 %v729, %v730
        %v732 = vadd.f32 %v721, %v731
        %s733 = sld [smem:[#allocation2 + $0x33]]
        %s734 = sld [smem:[#allocation2 + $0x73]]
        %s735 = sld [smem:[#allocation2 + $0xb3]]
        %v736 = vstv %s733
        %v737 = vmul.f32 %v171, %v736
        %v738 = vstv %s734
        %v739 = vadd.f32 %v737, %v738
        %v740 = vmax.f32 %v739, 0.0
        %v741 = vstv %s735
        %v742 = vmul.f32 %v740, %v741
        %v743 = vadd.f32 %v732, %v742
        %s744 = sld [smem:[#allocation2 + $0x34]]
        %s745 = sld [smem:[#allocation2 + $0x74]]
        %s746 = sld [smem:[#allocation2 + $0xb4]]
        %v747 = vstv %s744
        %v748 = vmul.f32 %v171, %v747
        %v749 = vstv %s745
        %v750 = vadd.f32 %v748, %v749
        %v751 = vmax.f32 %v750, 0.0
        %v752 = vstv %s746
        %v753 = vmul.f32 %v751, %v752
        %v754 = vadd.f32 %v743, %v753
        %s755 = sld [smem:[#allocation2 + $0x35]]
        %s756 = sld [smem:[#allocation2 + $0x75]]
        %s757 = sld [smem:[#allocation2 + $0xb5]]
        %v758 = vstv %s755
        %v759 = vmul.f32 %v171, %v758
        %v760 = vstv %s756
        %v761 = vadd.f32 %v759, %v760
        %v762 = vmax.f32 %v761, 0.0
        %v763 = vstv %s757
        %v764 = vmul.f32 %v762, %v763
        %v765 = vadd.f32 %v754, %v764
        %s766 = sld [smem:[#allocation2 + $0x36]]
        %s767 = sld [smem:[#allocation2 + $0x76]]
        %s768 = sld [smem:[#allocation2 + $0xb6]]
        %v769 = vstv %s766
        %v770 = vmul.f32 %v171, %v769
        %v771 = vstv %s767
        %v772 = vadd.f32 %v770, %v771
        %v773 = vmax.f32 %v772, 0.0
        %v774 = vstv %s768
        %v775 = vmul.f32 %v773, %v774
        %v776 = vadd.f32 %v765, %v775
        %s777 = sld [smem:[#allocation2 + $0x37]]
        %s778 = sld [smem:[#allocation2 + $0x77]]
        %s779 = sld [smem:[#allocation2 + $0xb7]]
        %v780 = vstv %s777
        %v781 = vmul.f32 %v171, %v780
        %v782 = vstv %s778
        %v783 = vadd.f32 %v781, %v782
        %v784 = vmax.f32 %v783, 0.0
        %v785 = vstv %s779
        %v786 = vmul.f32 %v784, %v785
        %v787 = vadd.f32 %v776, %v786
        %s788 = sld [smem:[#allocation2 + $0x38]]
        %s789 = sld [smem:[#allocation2 + $0x78]]
        %s790 = sld [smem:[#allocation2 + $0xb8]]
        %v791 = vstv %s788
        %v792 = vmul.f32 %v171, %v791
        %v793 = vstv %s789
        %v794 = vadd.f32 %v792, %v793
        %v795 = vmax.f32 %v794, 0.0
        %v796 = vstv %s790
        %v797 = vmul.f32 %v795, %v796
        %v798 = vadd.f32 %v787, %v797
        %s799 = sld [smem:[#allocation2 + $0x39]]
        %s800 = sld [smem:[#allocation2 + $0x79]]
        %s801 = sld [smem:[#allocation2 + $0xb9]]
        %v802 = vstv %s799
        %v803 = vmul.f32 %v171, %v802
        %v804 = vstv %s800
        %v805 = vadd.f32 %v803, %v804
        %v806 = vmax.f32 %v805, 0.0
        %v807 = vstv %s801
        %v808 = vmul.f32 %v806, %v807
        %v809 = vadd.f32 %v798, %v808
        %s810 = sld [smem:[#allocation2 + $0x3a]]
        %s811 = sld [smem:[#allocation2 + $0x7a]]
        %s812 = sld [smem:[#allocation2 + $0xba]]
        %v813 = vstv %s810
        %v814 = vmul.f32 %v171, %v813
        %v815 = vstv %s811
        %v816 = vadd.f32 %v814, %v815
        %v817 = vmax.f32 %v816, 0.0
        %v818 = vstv %s812
        %v819 = vmul.f32 %v817, %v818
        %v820 = vadd.f32 %v809, %v819
        %s821 = sld [smem:[#allocation2 + $0x3b]]
        %s822 = sld [smem:[#allocation2 + $0x7b]]
        %s823 = sld [smem:[#allocation2 + $0xbb]]
        %v824 = vstv %s821
        %v825 = vmul.f32 %v171, %v824
        %v826 = vstv %s822
        %v827 = vadd.f32 %v825, %v826
        %v828 = vmax.f32 %v827, 0.0
        %v829 = vstv %s823
        %v830 = vmul.f32 %v828, %v829
        %v831 = vadd.f32 %v820, %v830
        %s832 = sld [smem:[#allocation2 + $0x3c]]
        %s833 = sld [smem:[#allocation2 + $0x7c]]
        %s834 = sld [smem:[#allocation2 + $0xbc]]
        %v835 = vstv %s832
        %v836 = vmul.f32 %v171, %v835
        %v837 = vstv %s833
        %v838 = vadd.f32 %v836, %v837
        %v839 = vmax.f32 %v838, 0.0
        %v840 = vstv %s834
        %v841 = vmul.f32 %v839, %v840
        %v842 = vadd.f32 %v831, %v841
        %s843 = sld [smem:[#allocation2 + $0x3d]]
        %s844 = sld [smem:[#allocation2 + $0x7d]]
        %s845 = sld [smem:[#allocation2 + $0xbd]]
        %v846 = vstv %s843
        %v847 = vmul.f32 %v171, %v846
        %v848 = vstv %s844
        %v849 = vadd.f32 %v847, %v848
        %v850 = vmax.f32 %v849, 0.0
        %v851 = vstv %s845
        %v852 = vmul.f32 %v850, %v851
        %v853 = vadd.f32 %v842, %v852
        %s854 = sld [smem:[#allocation2 + $0x3e]]
        %s855 = sld [smem:[#allocation2 + $0x7e]]
        %s856 = sld [smem:[#allocation2 + $0xbe]]
        %v857 = vstv %s854
        %v858 = vmul.f32 %v171, %v857
        %v859 = vstv %s855
        %v860 = vadd.f32 %v858, %v859
        %v861 = vmax.f32 %v860, 0.0
        %v862 = vstv %s856
        %v863 = vmul.f32 %v861, %v862
        %v864 = vadd.f32 %v853, %v863
        %s865 = sld [smem:[#allocation2 + $0x3f]]
        %s866 = sld [smem:[#allocation2 + $0x7f]]
        %s867 = sld [smem:[#allocation2 + $0xbf]]
        %v868 = vstv %s865
        %v869 = vmul.f32 %v171, %v868
        %v870 = vstv %s866
        %v871 = vadd.f32 %v869, %v870
        %v872 = vmax.f32 %v871, 0.0
        %v873 = vstv %s867
        %v874 = vmul.f32 %v872, %v873
        %v875 = vadd.f32 %v864, %v874
        %s876 = sld [smem:[#allocation2 + $0xc0]]
        %v877 = vstv %s876
        %v878 = vadd.f32 %v875, %v877
        %879 = vst [vmem:[%s170] sm:$0xff] %v878
        %s880 = sand.u32 %s75, 1
        %s881 = scalar_lea.sflag [#allocation4], %s880
        %s882 = sand.u32 %s75, 1
        %s883 = smul.addr %s882, 8
        %s884 = scalar_lea.vmem [#allocation7], %s883
        // Predicated region
        $region37: #{tpu_custom_call.1} parent=27 // pred_check
          %p885 = pneg %p85
        $region38: #{tpu_custom_call.1} parent=27 // pred_check_branch
          %887 = sbr.rel (%p885) target = $region40
        $region39: #{tpu_custom_call.1} parent=27 // pred_region
          %s889 = ssub.s32 128, 128
          %890 = vsyncadd %s881, %s889
          %s891 = smul.addr %s20, 128
          %s892 = scalar_lea.hbm %s2, %s891
          %s894 = sshll.u32 %s884, 4
          %s895 = int_to_ptr.vmem [resolvable:$true] %s894
          %897 = dma.vmem_to_hbm [thread:$0]  %s895, 128, %s892, %s881
        $region40: #{tpu_custom_call.1} parent=27 // pred_fallthru
          _
      $region28: #{tpu_custom_call.1} parent=5 // pred_fallthru
        _
      %p898 = scmp.le.s32.totalorder 2, %s15
      // Predicated region
      $region41: #{tpu_custom_call.1} parent=5 // pred_check
        %p899 = pneg %p898
      $region42: #{tpu_custom_call.1} parent=5 // pred_check_branch
        %901 = sbr.rel (%p899) target = $region44
      $region43: #{tpu_custom_call.1} parent=5 // pred_region
        %s902 = ssub.s32 %s15, 2
        // Predicated region
        $region45: #{tpu_custom_call.1} parent=43 // pred_check
          %p903 = pneg %p91
        $region46: #{tpu_custom_call.1} parent=43 // pred_check_branch
          %905 = sbr.rel (%p903) target = $region48
        $region47: #{tpu_custom_call.1} parent=43 // pred_region
          %s906 = sand.u32 %s76, 1
          %s907 = scalar_lea.sflag [#allocation4], %s906
          %s908 = sand.u32 %s76, 1
          %s909 = smul.addr %s908, 8
          %s910 = scalar_lea.vmem [#allocation7], %s909
          %911 = dma.done %s907, 128
        $region48: #{tpu_custom_call.1} parent=43 // pred_fallthru
          _
      $region44: #{tpu_custom_call.1} parent=5 // pred_fallthru
        _
    $region6: #{tpu_custom_call.1} parent=1 // loop_footer
      %s19 = sadd.s32 1, %s15
    $region7: #{tpu_custom_call.1} parent=1 // loop_footer_branch
      %14 = sbr.rel target = $region3
    $region8: #{tpu_custom_call.1} parent=1 // loop_exit
      _
    %912 = vsyncpa [#allocation3], 1
    %s913 = scalar_lea.sflag [#allocation3], 1
    %914 = vsyncpa %s913, 1
    %915 = vsyncpa [#allocation4], 1
    %s916 = scalar_lea.sflag [#allocation4], 1
    %917 = vsyncpa %s916, 1
    %918 = vsyncpa [#allocation5], 1
    %s919 = scalar_lea.sflag [#allocation5], 1
    %920 = vsyncpa %s919, 1

</llo_original>
